<compile_context>
chip_gen: v6e
topology: v6e:2x2x1
jax: 0.10.0
libtpu: 0.0.40
codegen_flags: <defaults>
</compile_context>

<pallas_src>
import jax
import jax.numpy as jnp
from jax.experimental import pallas as pl
from jax.experimental.pallas import tpu as pltpu


# ---------------------------------------------------------------------------
# Fused kernel: raw NCHW in, (N, 1+k*k, C, Ho, Wo) out, space-to-depth folded.
# ---------------------------------------------------------------------------
def _make_fused_kernel(k, c_blk, ho_blk, wo_blk):
    inv = 1.0 / float(k * k)

    def kernel(x_ref, o_ref, t_ref):
        # x_ref: (1, c_blk, k*ho_blk, k*wo_blk)    raw NCHW tile
        # o_ref: (1, 1+k*k, c_blk, ho_blk, wo_blk) [low | phase(kh,kw)...] tile
        # t_ref: (k*wo_blk, ho_blk) f32 VMEM scratch for the transposed rows
        for ci in range(c_blk):
            quads = []  # (kh, kw, (ho_blk, wo_blk) slab)
            for kh in range(k):
                # Sublane-strided ref load: rows kh, kh+k, ... of the raw tile
                rows = x_ref[0, ci, pl.ds(kh, ho_blk, stride=k), :]
                rows = rows.astype(jnp.float32)          # (ho_blk, k*wo_blk)
                # Move W onto the sublane axis so the kw split is also a
                # sublane-strided access (lane axis never gets strided).
                t_ref[...] = rows.T                      # (k*wo_blk, ho_blk)
                for kw in range(k):
                    cols = t_ref[pl.ds(kw, wo_blk, stride=k), :]  # (wo_blk, ho_blk)
                    quads.append((kh, kw, cols.T))        # (ho_blk, wo_blk)

            # Area downsample == mean over the k*k phases (plain VPU adds on
            # dense slabs -- no cross-sublane reduce).
            low = quads[0][2]
            for _, _, q in quads[1:]:
                low = low + q
            low = low * inv
            o_ref[0, 0, ci, :, :] = low.astype(o_ref.dtype)

            # 'area' upsample at an integer scale is nearest replication, so
            # every phase subtracts the same low band.  PixelUnshuffle channel
            # order is (kh, kw, c) -> slot 1 + kh*k + kw.
            for kh, kw, q in quads:
                o_ref[0, 1 + kh * k + kw, ci, :, :] = (q - low).astype(o_ref.dtype)

    return kernel


def _pick_block(total, cap, mult):
    """Largest divisor of `total` that is <= cap, preferring multiples of
    `mult`.  Falls back to the full extent, so the grid always divides the
    array exactly (no out-of-bounds padding ever feeds the kernel)."""
    if total <= cap:
        return total
    fallback = None
    for d in range(cap, 0, -1):
        if total % d:
            continue
        if d % mult == 0:
            return d
        if fallback is None:
            fallback = d
    if fallback is not None and fallback * 4 >= mult:
        return fallback
    return total


def _forward_fused(x, k):
    N, C, H, W = x.shape
    Ho, Wo = H // k, W // k
    s2 = k * k

    # Tile caps: a few-MiB double-buffered footprint (fits v7x's 64 MiB VMEM /
    # 32 MiB scoped default as well as v5e/v6e's 128 MiB), rows preferring
    # multiples of 8 sublanes and lanes multiples of 128 so stores stay dense.
    c_blk = _pick_block(C, 4, 1)
    ho_blk = _pick_block(Ho, 64, 8)
    wo_blk = _pick_block(Wo, 256, 128)

    # v7x has two TensorCores: make sure the parallel grid has >= 2 steps even
    # for a single small image (no measurable effect on v5e/v6e).
    steps = N * (C // c_blk) * (Ho // ho_blk) * (Wo // wo_blk)
    if steps < 2:
        if ho_blk % 16 == 0:
            ho_blk //= 2
        elif wo_blk % 256 == 0:
            wo_blk //= 2

    grid = (N, C // c_blk, Ho // ho_blk, Wo // wo_blk)

    out5 = pl.pallas_call(
        _make_fused_kernel(k, c_blk, ho_blk, wo_blk),
        out_shape=jax.ShapeDtypeStruct((N, 1 + s2, C, Ho, Wo), x.dtype),
        grid=grid,
        in_specs=[pl.BlockSpec((1, c_blk, k * ho_blk, k * wo_blk),
                               lambda n, c, i, j: (n, c, i, j))],
        out_specs=pl.BlockSpec((1, 1 + s2, c_blk, ho_blk, wo_blk),
                               lambda n, c, i, j: (n, 0, c, i, j)),
        scratch_shapes=[pltpu.VMEM((k * wo_blk, ho_blk), jnp.float32)],
        compiler_params=pltpu.CompilerParams(
            dimension_semantics=("parallel",) * 4),
    )(x)

    # Merging the two leading channel dims is a free reshape (minor dims are
    # untouched).  Channel layout is [low (C) | phase(0,0) (C) | ...], i.e.
    # exactly torch.cat((low, pixel_unshuffle(x - up(low))), dim=1).
    return out5.reshape(N, (1 + s2) * C, Ho, Wo)


# ---------------------------------------------------------------------------
# Proven fallback (previous version): XLA space-to-depth + lane-dense kernel.
# Used only if the fused path cannot be lowered on this jax/libtpu build.
# ---------------------------------------------------------------------------
def _make_flat_kernel(s2):
    inv = 1.0 / float(s2)

    def kernel(x_ref, o_ref):
        x = x_ref[...].astype(jnp.float32)               # (1, s2, tile)
        low = jnp.sum(x, axis=1, keepdims=True) * inv
        o_ref[:, 0:1, :] = low.astype(o_ref.dtype)
        o_ref[:, 1:, :] = (x - low).astype(o_ref.dtype)

    return kernel


def _forward_fallback(x, k, max_tile=32768):
    N, C, H, W = x.shape
    Ho, Wo = H // k, W // k
    s2 = k * k
    F = C * Ho * Wo

    xr = x.reshape(N, C, Ho, k, Wo, k)
    xr = jnp.transpose(xr, (0, 3, 5, 1, 2, 4)).reshape(N, s2, F)

    tile = F if F <= max_tile else max_tile
    n_tiles = pl.cdiv(F, tile)

    out_flat = pl.pallas_call(
        _make_flat_kernel(s2),
        out_shape=jax.ShapeDtypeStruct((N, 1 + s2, F), x.dtype),
        grid=(N, n_tiles),
        in_specs=[pl.BlockSpec((1, s2, tile), lambda n, t: (n, 0, t))],
        out_specs=pl.BlockSpec((1, 1 + s2, tile), lambda n, t: (n, 0, t)),
        compiler_params=pltpu.CompilerParams(
            dimension_semantics=("parallel", "parallel")),
    )(xr)
    return out_flat.reshape(N, (1 + s2) * C, Ho, Wo)


def frequency_analyzer_forward(x, k=2):
    """Pallas implementation of FrequencyAnalyzer.forward(x, rev=False)."""
    try:
        return _forward_fused(x, k)
    except Exception:
        # Capability fallback: if the in-kernel strided-slice relayout is not
        # supported by this Mosaic build, use the two-pass Pallas formulation.
        return _forward_fallback(x, k)


def _reference_forward(x, k=2):
    """Pure-JAX reference mirroring the PyTorch forward (rev=False)."""
    N, C, H, W = x.shape
    Ho, Wo = H // k, W // k
    low = x.reshape(N, C, Ho, k, Wo, k).mean(axis=(3, 5))
    up = jnp.repeat(jnp.repeat(low, k, axis=2), k, axis=3)
    diff = x - up
    d = diff.reshape(N, C, Ho, k, Wo, k)
    high = jnp.transpose(d, (0, 3, 5, 1, 2, 4)).reshape(N, C * k * k, Ho, Wo)
    return jnp.concatenate([low, high], axis=1)


if __name__ == "__main__":
    key = jax.random.PRNGKey(0)
    N, C, H, W = 2, 4, 16, 16  # small NCHW input
    x = jax.random.normal(key, (N, C, H, W), dtype=jnp.float32)

    out = jax.block_until_ready(frequency_analyzer_forward(x, k=2))

    ref = _reference_forward(x, k=2)
    assert out.shape == (N, C + C * 4, H // 2, W // 2), out.shape
    assert jnp.allclose(out, ref, atol=1e-5, rtol=1e-5), \
        float(jnp.max(jnp.abs(out - ref)))
    print("KERNEL_OK")
</pallas_src>

<mosaic_0001>
module attributes {stable_mosaic.version = 11 : i64} {
  func.func @kernel(%arg0: i32, %arg1: i32, %arg2: i32, %arg3: i32, %arg4: memref<1x4x16x16xf32, #tpu.memory_space<vmem>>, %arg5: memref<1x5x4x8x8xf32, #tpu.memory_space<vmem>>, %arg6: memref<16x8xf32, #tpu.memory_space<vmem>>) attributes {dimension_semantics = [#tpu.dimension_semantics<parallel>, #tpu.dimension_semantics<parallel>, #tpu.dimension_semantics<parallel>, #tpu.dimension_semantics<parallel>], iteration_bounds = array<i64: 2, 1, 1, 1>, scalar_prefetch = 0 : i64, scratch_operands = 1 : i64, tpu.core_type = #tpu.core_type<tc>, window_params = [{transform_indices = @transform_0, window_bounds = array<i64: 1, 4, 16, 16>}, {transform_indices = @transform_1, window_bounds = array<i64: 1, 5, 4, 8, 8>}]} {
    %c0 = arith.constant 0 : index
    %c0_0 = arith.constant 0 : index
    %c0_1 = arith.constant 0 : index
    %c0_2 = arith.constant 0 : index
    %0 = tpu.strided_load %arg4[%c0, %c0_0, %c0_1, %c0_2] {strides = array<i32: 1, 1, 2, 1>} : memref<1x4x16x16xf32, #tpu.memory_space<vmem>>, vector<1x1x8x16xf32>
    %1 = vector.shape_cast %0 : vector<1x1x8x16xf32> to vector<8x16xf32>
    %2 = tpu.transpose %1, [1, 0] : vector<8x16xf32> -> vector<16x8xf32>
    %c0_3 = arith.constant 0 : index
    %c0_4 = arith.constant 0 : index
    %3 = vector.load %arg6[%c0_3, %c0_4] : memref<16x8xf32, #tpu.memory_space<vmem>>, vector<16x8xf32>
    tpu.vector_store %arg6[%c0_3, %c0_4], %2 {strides = array<i32>} : memref<16x8xf32, #tpu.memory_space<vmem>>, vector<16x8xf32>,
    %c0_5 = arith.constant 0 : index
    %c0_6 = arith.constant 0 : index
    %4 = tpu.strided_load %arg6[%c0_5, %c0_6] {strides = array<i32: 2, 1>} : memref<16x8xf32, #tpu.memory_space<vmem>>, vector<8x8xf32>
    %5 = tpu.transpose %4, [1, 0] : vector<8x8xf32> -> vector<8x8xf32>
    %c1 = arith.constant 1 : index
    %c0_7 = arith.constant 0 : index
    %6 = tpu.strided_load %arg6[%c1, %c0_7] {strides = array<i32: 2, 1>} : memref<16x8xf32, #tpu.memory_space<vmem>>, vector<8x8xf32>
    %7 = tpu.transpose %6, [1, 0] : vector<8x8xf32> -> vector<8x8xf32>
    %c0_8 = arith.constant 0 : index
    %c0_9 = arith.constant 0 : index
    %c1_10 = arith.constant 1 : index
    %c0_11 = arith.constant 0 : index
    %8 = tpu.strided_load %arg4[%c0_8, %c0_9, %c1_10, %c0_11] {strides = array<i32: 1, 1, 2, 1>} : memref<1x4x16x16xf32, #tpu.memory_space<vmem>>, vector<1x1x8x16xf32>
    %9 = vector.shape_cast %8 : vector<1x1x8x16xf32> to vector<8x16xf32>
    %10 = tpu.transpose %9, [1, 0] : vector<8x16xf32> -> vector<16x8xf32>
    %c0_12 = arith.constant 0 : index
    %c0_13 = arith.constant 0 : index
    %11 = vector.load %arg6[%c0_12, %c0_13] : memref<16x8xf32, #tpu.memory_space<vmem>>, vector<16x8xf32>
    tpu.vector_store %arg6[%c0_12, %c0_13], %10 {strides = array<i32>} : memref<16x8xf32, #tpu.memory_space<vmem>>, vector<16x8xf32>,
    %c0_14 = arith.constant 0 : index
    %c0_15 = arith.constant 0 : index
    %12 = tpu.strided_load %arg6[%c0_14, %c0_15] {strides = array<i32: 2, 1>} : memref<16x8xf32, #tpu.memory_space<vmem>>, vector<8x8xf32>
    %13 = tpu.transpose %12, [1, 0] : vector<8x8xf32> -> vector<8x8xf32>
    %c1_16 = arith.constant 1 : index
    %c0_17 = arith.constant 0 : index
    %14 = tpu.strided_load %arg6[%c1_16, %c0_17] {strides = array<i32: 2, 1>} : memref<16x8xf32, #tpu.memory_space<vmem>>, vector<8x8xf32>
    %15 = tpu.transpose %14, [1, 0] : vector<8x8xf32> -> vector<8x8xf32>
    %16 = arith.addf %5, %7 : vector<8x8xf32>
    %17 = arith.addf %16, %13 : vector<8x8xf32>
    %18 = arith.addf %17, %15 : vector<8x8xf32>
    %cst = arith.constant 2.500000e-01 : f32
    %19 = vector.broadcast %cst : f32 to vector<8x8xf32>
    %20 = arith.mulf %18, %19 : vector<8x8xf32>
    %c0_18 = arith.constant 0 : index
    %c0_19 = arith.constant 0 : index
    %c0_20 = arith.constant 0 : index
    %c0_21 = arith.constant 0 : index
    %c0_22 = arith.constant 0 : index
    %21 = vector.load %arg5[%c0_18, %c0_19, %c0_20, %c0_21, %c0_22] : memref<1x5x4x8x8xf32, #tpu.memory_space<vmem>>, vector<1x1x1x8x8xf32>
    %22 = vector.shape_cast %21 : vector<1x1x1x8x8xf32> to vector<8x8xf32>
    %23 = vector.shape_cast %20 : vector<8x8xf32> to vector<1x1x1x8x8xf32>
    tpu.vector_store %arg5[%c0_18, %c0_19, %c0_20, %c0_21, %c0_22], %23 {strides = array<i32>} : memref<1x5x4x8x8xf32, #tpu.memory_space<vmem>>, vector<1x1x1x8x8xf32>,
    %24 = arith.subf %5, %20 : vector<8x8xf32>
    %c0_23 = arith.constant 0 : index
    %c1_24 = arith.constant 1 : index
    %c0_25 = arith.constant 0 : index
    %c0_26 = arith.constant 0 : index
    %c0_27 = arith.constant 0 : index
    %25 = vector.load %arg5[%c0_23, %c1_24, %c0_25, %c0_26, %c0_27] : memref<1x5x4x8x8xf32, #tpu.memory_space<vmem>>, vector<1x1x1x8x8xf32>
    %26 = vector.shape_cast %25 : vector<1x1x1x8x8xf32> to vector<8x8xf32>
    %27 = vector.shape_cast %24 : vector<8x8xf32> to vector<1x1x1x8x8xf32>
    tpu.vector_store %arg5[%c0_23, %c1_24, %c0_25, %c0_26, %c0_27], %27 {strides = array<i32>} : memref<1x5x4x8x8xf32, #tpu.memory_space<vmem>>, vector<1x1x1x8x8xf32>,
    %28 = arith.subf %7, %20 : vector<8x8xf32>
    %c0_28 = arith.constant 0 : index
    %c2 = arith.constant 2 : index
    %c0_29 = arith.constant 0 : index
    %c0_30 = arith.constant 0 : index
    %c0_31 = arith.constant 0 : index
    %29 = vector.load %arg5[%c0_28, %c2, %c0_29, %c0_30, %c0_31] : memref<1x5x4x8x8xf32, #tpu.memory_space<vmem>>, vector<1x1x1x8x8xf32>
    %30 = vector.shape_cast %29 : vector<1x1x1x8x8xf32> to vector<8x8xf32>
    %31 = vector.shape_cast %28 : vector<8x8xf32> to vector<1x1x1x8x8xf32>
    tpu.vector_store %arg5[%c0_28, %c2, %c0_29, %c0_30, %c0_31], %31 {strides = array<i32>} : memref<1x5x4x8x8xf32, #tpu.memory_space<vmem>>, vector<1x1x1x8x8xf32>,
    %32 = arith.subf %13, %20 : vector<8x8xf32>
    %c0_32 = arith.constant 0 : index
    %c3 = arith.constant 3 : index
    %c0_33 = arith.constant 0 : index
    %c0_34 = arith.constant 0 : index
    %c0_35 = arith.constant 0 : index
    %33 = vector.load %arg5[%c0_32, %c3, %c0_33, %c0_34, %c0_35] : memref<1x5x4x8x8xf32, #tpu.memory_space<vmem>>, vector<1x1x1x8x8xf32>
    %34 = vector.shape_cast %33 : vector<1x1x1x8x8xf32> to vector<8x8xf32>
    %35 = vector.shape_cast %32 : vector<8x8xf32> to vector<1x1x1x8x8xf32>
    tpu.vector_store %arg5[%c0_32, %c3, %c0_33, %c0_34, %c0_35], %35 {strides = array<i32>} : memref<1x5x4x8x8xf32, #tpu.memory_space<vmem>>, vector<1x1x1x8x8xf32>,
    %36 = arith.subf %15, %20 : vector<8x8xf32>
    %c0_36 = arith.constant 0 : index
    %c4 = arith.constant 4 : index
    %c0_37 = arith.constant 0 : index
    %c0_38 = arith.constant 0 : index
    %c0_39 = arith.constant 0 : index
    %37 = vector.load %arg5[%c0_36, %c4, %c0_37, %c0_38, %c0_39] : memref<1x5x4x8x8xf32, #tpu.memory_space<vmem>>, vector<1x1x1x8x8xf32>
    %38 = vector.shape_cast %37 : vector<1x1x1x8x8xf32> to vector<8x8xf32>
    %39 = vector.shape_cast %36 : vector<8x8xf32> to vector<1x1x1x8x8xf32>
    tpu.vector_store %arg5[%c0_36, %c4, %c0_37, %c0_38, %c0_39], %39 {strides = array<i32>} : memref<1x5x4x8x8xf32, #tpu.memory_space<vmem>>, vector<1x1x1x8x8xf32>,
    %c0_40 = arith.constant 0 : index
    %c1_41 = arith.constant 1 : index
    %c0_42 = arith.constant 0 : index
    %c0_43 = arith.constant 0 : index
    %40 = tpu.strided_load %arg4[%c0_40, %c1_41, %c0_42, %c0_43] {strides = array<i32: 1, 1, 2, 1>} : memref<1x4x16x16xf32, #tpu.memory_space<vmem>>, vector<1x1x8x16xf32>
    %41 = vector.shape_cast %40 : vector<1x1x8x16xf32> to vector<8x16xf32>
    %42 = tpu.transpose %41, [1, 0] : vector<8x16xf32> -> vector<16x8xf32>
    %c0_44 = arith.constant 0 : index
    %c0_45 = arith.constant 0 : index
    %43 = vector.load %arg6[%c0_44, %c0_45] : memref<16x8xf32, #tpu.memory_space<vmem>>, vector<16x8xf32>
    tpu.vector_store %arg6[%c0_44, %c0_45], %42 {strides = array<i32>} : memref<16x8xf32, #tpu.memory_space<vmem>>, vector<16x8xf32>,
    %c0_46 = arith.constant 0 : index
    %c0_47 = arith.constant 0 : index
    %44 = tpu.strided_load %arg6[%c0_46, %c0_47] {strides = array<i32: 2, 1>} : memref<16x8xf32, #tpu.memory_space<vmem>>, vector<8x8xf32>
    %45 = tpu.transpose %44, [1, 0] : vector<8x8xf32> -> vector<8x8xf32>
    %c1_48 = arith.constant 1 : index
    %c0_49 = arith.constant 0 : index
    %46 = tpu.strided_load %arg6[%c1_48, %c0_49] {strides = array<i32: 2, 1>} : memref<16x8xf32, #tpu.memory_space<vmem>>, vector<8x8xf32>
    %47 = tpu.transpose %46, [1, 0] : vector<8x8xf32> -> vector<8x8xf32>
    %c0_50 = arith.constant 0 : index
    %c1_51 = arith.constant 1 : index
    %c1_52 = arith.constant 1 : index
    %c0_53 = arith.constant 0 : index
    %48 = tpu.strided_load %arg4[%c0_50, %c1_51, %c1_52, %c0_53] {strides = array<i32: 1, 1, 2, 1>} : memref<1x4x16x16xf32, #tpu.memory_space<vmem>>, vector<1x1x8x16xf32>
    %49 = vector.shape_cast %48 : vector<1x1x8x16xf32> to vector<8x16xf32>
    %50 = tpu.transpose %49, [1, 0] : vector<8x16xf32> -> vector<16x8xf32>
    %c0_54 = arith.constant 0 : index
    %c0_55 = arith.constant 0 : index
    %51 = vector.load %arg6[%c0_54, %c0_55] : memref<16x8xf32, #tpu.memory_space<vmem>>, vector<16x8xf32>
    tpu.vector_store %arg6[%c0_54, %c0_55], %50 {strides = array<i32>} : memref<16x8xf32, #tpu.memory_space<vmem>>, vector<16x8xf32>,
    %c0_56 = arith.constant 0 : index
    %c0_57 = arith.constant 0 : index
    %52 = tpu.strided_load %arg6[%c0_56, %c0_57] {strides = array<i32: 2, 1>} : memref<16x8xf32, #tpu.memory_space<vmem>>, vector<8x8xf32>
    %53 = tpu.transpose %52, [1, 0] : vector<8x8xf32> -> vector<8x8xf32>
    %c1_58 = arith.constant 1 : index
    %c0_59 = arith.constant 0 : index
    %54 = tpu.strided_load %arg6[%c1_58, %c0_59] {strides = array<i32: 2, 1>} : memref<16x8xf32, #tpu.memory_space<vmem>>, vector<8x8xf32>
    %55 = tpu.transpose %54, [1, 0] : vector<8x8xf32> -> vector<8x8xf32>
    %56 = arith.addf %45, %47 : vector<8x8xf32>
    %57 = arith.addf %56, %53 : vector<8x8xf32>
    %58 = arith.addf %57, %55 : vector<8x8xf32>
    %cst_60 = arith.constant 2.500000e-01 : f32
    %59 = vector.broadcast %cst_60 : f32 to vector<8x8xf32>
    %60 = arith.mulf %58, %59 : vector<8x8xf32>
    %c0_61 = arith.constant 0 : index
    %c0_62 = arith.constant 0 : index
    %c1_63 = arith.constant 1 : index
    %c0_64 = arith.constant 0 : index
    %c0_65 = arith.constant 0 : index
    %61 = vector.load %arg5[%c0_61, %c0_62, %c1_63, %c0_64, %c0_65] : memref<1x5x4x8x8xf32, #tpu.memory_space<vmem>>, vector<1x1x1x8x8xf32>
    %62 = vector.shape_cast %61 : vector<1x1x1x8x8xf32> to vector<8x8xf32>
    %63 = vector.shape_cast %60 : vector<8x8xf32> to vector<1x1x1x8x8xf32>
    tpu.vector_store %arg5[%c0_61, %c0_62, %c1_63, %c0_64, %c0_65], %63 {strides = array<i32>} : memref<1x5x4x8x8xf32, #tpu.memory_space<vmem>>, vector<1x1x1x8x8xf32>,
    %64 = arith.subf %45, %60 : vector<8x8xf32>
    %c0_66 = arith.constant 0 : index
    %c1_67 = arith.constant 1 : index
    %c1_68 = arith.constant 1 : index
    %c0_69 = arith.constant 0 : index
    %c0_70 = arith.constant 0 : index
    %65 = vector.load %arg5[%c0_66, %c1_67, %c1_68, %c0_69, %c0_70] : memref<1x5x4x8x8xf32, #tpu.memory_space<vmem>>, vector<1x1x1x8x8xf32>
    %66 = vector.shape_cast %65 : vector<1x1x1x8x8xf32> to vector<8x8xf32>
    %67 = vector.shape_cast %64 : vector<8x8xf32> to vector<1x1x1x8x8xf32>
    tpu.vector_store %arg5[%c0_66, %c1_67, %c1_68, %c0_69, %c0_70], %67 {strides = array<i32>} : memref<1x5x4x8x8xf32, #tpu.memory_space<vmem>>, vector<1x1x1x8x8xf32>,
    %68 = arith.subf %47, %60 : vector<8x8xf32>
    %c0_71 = arith.constant 0 : index
    %c2_72 = arith.constant 2 : index
    %c1_73 = arith.constant 1 : index
    %c0_74 = arith.constant 0 : index
    %c0_75 = arith.constant 0 : index
    %69 = vector.load %arg5[%c0_71, %c2_72, %c1_73, %c0_74, %c0_75] : memref<1x5x4x8x8xf32, #tpu.memory_space<vmem>>, vector<1x1x1x8x8xf32>
    %70 = vector.shape_cast %69 : vector<1x1x1x8x8xf32> to vector<8x8xf32>
    %71 = vector.shape_cast %68 : vector<8x8xf32> to vector<1x1x1x8x8xf32>
    tpu.vector_store %arg5[%c0_71, %c2_72, %c1_73, %c0_74, %c0_75], %71 {strides = array<i32>} : memref<1x5x4x8x8xf32, #tpu.memory_space<vmem>>, vector<1x1x1x8x8xf32>,
    %72 = arith.subf %53, %60 : vector<8x8xf32>
    %c0_76 = arith.constant 0 : index
    %c3_77 = arith.constant 3 : index
    %c1_78 = arith.constant 1 : index
    %c0_79 = arith.constant 0 : index
    %c0_80 = arith.constant 0 : index
    %73 = vector.load %arg5[%c0_76, %c3_77, %c1_78, %c0_79, %c0_80] : memref<1x5x4x8x8xf32, #tpu.memory_space<vmem>>, vector<1x1x1x8x8xf32>
    %74 = vector.shape_cast %73 : vector<1x1x1x8x8xf32> to vector<8x8xf32>
    %75 = vector.shape_cast %72 : vector<8x8xf32> to vector<1x1x1x8x8xf32>
    tpu.vector_store %arg5[%c0_76, %c3_77, %c1_78, %c0_79, %c0_80], %75 {strides = array<i32>} : memref<1x5x4x8x8xf32, #tpu.memory_space<vmem>>, vector<1x1x1x8x8xf32>,
    %76 = arith.subf %55, %60 : vector<8x8xf32>
    %c0_81 = arith.constant 0 : index
    %c4_82 = arith.constant 4 : index
    %c1_83 = arith.constant 1 : index
    %c0_84 = arith.constant 0 : index
    %c0_85 = arith.constant 0 : index
    %77 = vector.load %arg5[%c0_81, %c4_82, %c1_83, %c0_84, %c0_85] : memref<1x5x4x8x8xf32, #tpu.memory_space<vmem>>, vector<1x1x1x8x8xf32>
    %78 = vector.shape_cast %77 : vector<1x1x1x8x8xf32> to vector<8x8xf32>
    %79 = vector.shape_cast %76 : vector<8x8xf32> to vector<1x1x1x8x8xf32>
    tpu.vector_store %arg5[%c0_81, %c4_82, %c1_83, %c0_84, %c0_85], %79 {strides = array<i32>} : memref<1x5x4x8x8xf32, #tpu.memory_space<vmem>>, vector<1x1x1x8x8xf32>,
    %c0_86 = arith.constant 0 : index
    %c2_87 = arith.constant 2 : index
    %c0_88 = arith.constant 0 : index
    %c0_89 = arith.constant 0 : index
    %80 = tpu.strided_load %arg4[%c0_86, %c2_87, %c0_88, %c0_89] {strides = array<i32: 1, 1, 2, 1>} : memref<1x4x16x16xf32, #tpu.memory_space<vmem>>, vector<1x1x8x16xf32>
    %81 = vector.shape_cast %80 : vector<1x1x8x16xf32> to vector<8x16xf32>
    %82 = tpu.transpose %81, [1, 0] : vector<8x16xf32> -> vector<16x8xf32>
    %c0_90 = arith.constant 0 : index
    %c0_91 = arith.constant 0 : index
    %83 = vector.load %arg6[%c0_90, %c0_91] : memref<16x8xf32, #tpu.memory_space<vmem>>, vector<16x8xf32>
    tpu.vector_store %arg6[%c0_90, %c0_91], %82 {strides = array<i32>} : memref<16x8xf32, #tpu.memory_space<vmem>>, vector<16x8xf32>,
    %c0_92 = arith.constant 0 : index
    %c0_93 = arith.constant 0 : index
    %84 = tpu.strided_load %arg6[%c0_92, %c0_93] {strides = array<i32: 2, 1>} : memref<16x8xf32, #tpu.memory_space<vmem>>, vector<8x8xf32>
    %85 = tpu.transpose %84, [1, 0] : vector<8x8xf32> -> vector<8x8xf32>
    %c1_94 = arith.constant 1 : index
    %c0_95 = arith.constant 0 : index
    %86 = tpu.strided_load %arg6[%c1_94, %c0_95] {strides = array<i32: 2, 1>} : memref<16x8xf32, #tpu.memory_space<vmem>>, vector<8x8xf32>
    %87 = tpu.transpose %86, [1, 0] : vector<8x8xf32> -> vector<8x8xf32>
    %c0_96 = arith.constant 0 : index
    %c2_97 = arith.constant 2 : index
    %c1_98 = arith.constant 1 : index
    %c0_99 = arith.constant 0 : index
    %88 = tpu.strided_load %arg4[%c0_96, %c2_97, %c1_98, %c0_99] {strides = array<i32: 1, 1, 2, 1>} : memref<1x4x16x16xf32, #tpu.memory_space<vmem>>, vector<1x1x8x16xf32>
    %89 = vector.shape_cast %88 : vector<1x1x8x16xf32> to vector<8x16xf32>
    %90 = tpu.transpose %89, [1, 0] : vector<8x16xf32> -> vector<16x8xf32>
    %c0_100 = arith.constant 0 : index
    %c0_101 = arith.constant 0 : index
    %91 = vector.load %arg6[%c0_100, %c0_101] : memref<16x8xf32, #tpu.memory_space<vmem>>, vector<16x8xf32>
    tpu.vector_store %arg6[%c0_100, %c0_101], %90 {strides = array<i32>} : memref<16x8xf32, #tpu.memory_space<vmem>>, vector<16x8xf32>,
    %c0_102 = arith.constant 0 : index
    %c0_103 = arith.constant 0 : index
    %92 = tpu.strided_load %arg6[%c0_102, %c0_103] {strides = array<i32: 2, 1>} : memref<16x8xf32, #tpu.memory_space<vmem>>, vector<8x8xf32>
    %93 = tpu.transpose %92, [1, 0] : vector<8x8xf32> -> vector<8x8xf32>
    %c1_104 = arith.constant 1 : index
    %c0_105 = arith.constant 0 : index
    %94 = tpu.strided_load %arg6[%c1_104, %c0_105] {strides = array<i32: 2, 1>} : memref<16x8xf32, #tpu.memory_space<vmem>>, vector<8x8xf32>
    %95 = tpu.transpose %94, [1, 0] : vector<8x8xf32> -> vector<8x8xf32>
    %96 = arith.addf %85, %87 : vector<8x8xf32>
    %97 = arith.addf %96, %93 : vector<8x8xf32>
    %98 = arith.addf %97, %95 : vector<8x8xf32>
    %cst_106 = arith.constant 2.500000e-01 : f32
    %99 = vector.broadcast %cst_106 : f32 to vector<8x8xf32>
    %100 = arith.mulf %98, %99 : vector<8x8xf32>
    %c0_107 = arith.constant 0 : index
    %c0_108 = arith.constant 0 : index
    %c2_109 = arith.constant 2 : index
    %c0_110 = arith.constant 0 : index
    %c0_111 = arith.constant 0 : index
    %101 = vector.load %arg5[%c0_107, %c0_108, %c2_109, %c0_110, %c0_111] : memref<1x5x4x8x8xf32, #tpu.memory_space<vmem>>, vector<1x1x1x8x8xf32>
    %102 = vector.shape_cast %101 : vector<1x1x1x8x8xf32> to vector<8x8xf32>
    %103 = vector.shape_cast %100 : vector<8x8xf32> to vector<1x1x1x8x8xf32>
    tpu.vector_store %arg5[%c0_107, %c0_108, %c2_109, %c0_110, %c0_111], %103 {strides = array<i32>} : memref<1x5x4x8x8xf32, #tpu.memory_space<vmem>>, vector<1x1x1x8x8xf32>,
    %104 = arith.subf %85, %100 : vector<8x8xf32>
    %c0_112 = arith.constant 0 : index
    %c1_113 = arith.constant 1 : index
    %c2_114 = arith.constant 2 : index
    %c0_115 = arith.constant 0 : index
    %c0_116 = arith.constant 0 : index
    %105 = vector.load %arg5[%c0_112, %c1_113, %c2_114, %c0_115, %c0_116] : memref<1x5x4x8x8xf32, #tpu.memory_space<vmem>>, vector<1x1x1x8x8xf32>
    %106 = vector.shape_cast %105 : vector<1x1x1x8x8xf32> to vector<8x8xf32>
    %107 = vector.shape_cast %104 : vector<8x8xf32> to vector<1x1x1x8x8xf32>
    tpu.vector_store %arg5[%c0_112, %c1_113, %c2_114, %c0_115, %c0_116], %107 {strides = array<i32>} : memref<1x5x4x8x8xf32, #tpu.memory_space<vmem>>, vector<1x1x1x8x8xf32>,
    %108 = arith.subf %87, %100 : vector<8x8xf32>
    %c0_117 = arith.constant 0 : index
    %c2_118 = arith.constant 2 : index
    %c2_119 = arith.constant 2 : index
    %c0_120 = arith.constant 0 : index
    %c0_121 = arith.constant 0 : index
    %109 = vector.load %arg5[%c0_117, %c2_118, %c2_119, %c0_120, %c0_121] : memref<1x5x4x8x8xf32, #tpu.memory_space<vmem>>, vector<1x1x1x8x8xf32>
    %110 = vector.shape_cast %109 : vector<1x1x1x8x8xf32> to vector<8x8xf32>
    %111 = vector.shape_cast %108 : vector<8x8xf32> to vector<1x1x1x8x8xf32>
    tpu.vector_store %arg5[%c0_117, %c2_118, %c2_119, %c0_120, %c0_121], %111 {strides = array<i32>} : memref<1x5x4x8x8xf32, #tpu.memory_space<vmem>>, vector<1x1x1x8x8xf32>,
    %112 = arith.subf %93, %100 : vector<8x8xf32>
    %c0_122 = arith.constant 0 : index
    %c3_123 = arith.constant 3 : index
    %c2_124 = arith.constant 2 : index
    %c0_125 = arith.constant 0 : index
    %c0_126 = arith.constant 0 : index
    %113 = vector.load %arg5[%c0_122, %c3_123, %c2_124, %c0_125, %c0_126] : memref<1x5x4x8x8xf32, #tpu.memory_space<vmem>>, vector<1x1x1x8x8xf32>
    %114 = vector.shape_cast %113 : vector<1x1x1x8x8xf32> to vector<8x8xf32>
    %115 = vector.shape_cast %112 : vector<8x8xf32> to vector<1x1x1x8x8xf32>
    tpu.vector_store %arg5[%c0_122, %c3_123, %c2_124, %c0_125, %c0_126], %115 {strides = array<i32>} : memref<1x5x4x8x8xf32, #tpu.memory_space<vmem>>, vector<1x1x1x8x8xf32>,
    %116 = arith.subf %95, %100 : vector<8x8xf32>
    %c0_127 = arith.constant 0 : index
    %c4_128 = arith.constant 4 : index
    %c2_129 = arith.constant 2 : index
    %c0_130 = arith.constant 0 : index
    %c0_131 = arith.constant 0 : index
    %117 = vector.load %arg5[%c0_127, %c4_128, %c2_129, %c0_130, %c0_131] : memref<1x5x4x8x8xf32, #tpu.memory_space<vmem>>, vector<1x1x1x8x8xf32>
    %118 = vector.shape_cast %117 : vector<1x1x1x8x8xf32> to vector<8x8xf32>
    %119 = vector.shape_cast %116 : vector<8x8xf32> to vector<1x1x1x8x8xf32>
    tpu.vector_store %arg5[%c0_127, %c4_128, %c2_129, %c0_130, %c0_131], %119 {strides = array<i32>} : memref<1x5x4x8x8xf32, #tpu.memory_space<vmem>>, vector<1x1x1x8x8xf32>,
    %c0_132 = arith.constant 0 : index
    %c3_133 = arith.constant 3 : index
    %c0_134 = arith.constant 0 : index
    %c0_135 = arith.constant 0 : index
    %120 = tpu.strided_load %arg4[%c0_132, %c3_133, %c0_134, %c0_135] {strides = array<i32: 1, 1, 2, 1>} : memref<1x4x16x16xf32, #tpu.memory_space<vmem>>, vector<1x1x8x16xf32>
    %121 = vector.shape_cast %120 : vector<1x1x8x16xf32> to vector<8x16xf32>
    %122 = tpu.transpose %121, [1, 0] : vector<8x16xf32> -> vector<16x8xf32>
    %c0_136 = arith.constant 0 : index
    %c0_137 = arith.constant 0 : index
    %123 = vector.load %arg6[%c0_136, %c0_137] : memref<16x8xf32, #tpu.memory_space<vmem>>, vector<16x8xf32>
    tpu.vector_store %arg6[%c0_136, %c0_137], %122 {strides = array<i32>} : memref<16x8xf32, #tpu.memory_space<vmem>>, vector<16x8xf32>,
    %c0_138 = arith.constant 0 : index
    %c0_139 = arith.constant 0 : index
    %124 = tpu.strided_load %arg6[%c0_138, %c0_139] {strides = array<i32: 2, 1>} : memref<16x8xf32, #tpu.memory_space<vmem>>, vector<8x8xf32>
    %125 = tpu.transpose %124, [1, 0] : vector<8x8xf32> -> vector<8x8xf32>
    %c1_140 = arith.constant 1 : index
    %c0_141 = arith.constant 0 : index
    %126 = tpu.strided_load %arg6[%c1_140, %c0_141] {strides = array<i32: 2, 1>} : memref<16x8xf32, #tpu.memory_space<vmem>>, vector<8x8xf32>
    %127 = tpu.transpose %126, [1, 0] : vector<8x8xf32> -> vector<8x8xf32>
    %c0_142 = arith.constant 0 : index
    %c3_143 = arith.constant 3 : index
    %c1_144 = arith.constant 1 : index
    %c0_145 = arith.constant 0 : index
    %128 = tpu.strided_load %arg4[%c0_142, %c3_143, %c1_144, %c0_145] {strides = array<i32: 1, 1, 2, 1>} : memref<1x4x16x16xf32, #tpu.memory_space<vmem>>, vector<1x1x8x16xf32>
    %129 = vector.shape_cast %128 : vector<1x1x8x16xf32> to vector<8x16xf32>
    %130 = tpu.transpose %129, [1, 0] : vector<8x16xf32> -> vector<16x8xf32>
    %c0_146 = arith.constant 0 : index
    %c0_147 = arith.constant 0 : index
    %131 = vector.load %arg6[%c0_146, %c0_147] : memref<16x8xf32, #tpu.memory_space<vmem>>, vector<16x8xf32>
    tpu.vector_store %arg6[%c0_146, %c0_147], %130 {strides = array<i32>} : memref<16x8xf32, #tpu.memory_space<vmem>>, vector<16x8xf32>,
    %c0_148 = arith.constant 0 : index
    %c0_149 = arith.constant 0 : index
    %132 = tpu.strided_load %arg6[%c0_148, %c0_149] {strides = array<i32: 2, 1>} : memref<16x8xf32, #tpu.memory_space<vmem>>, vector<8x8xf32>
    %133 = tpu.transpose %132, [1, 0] : vector<8x8xf32> -> vector<8x8xf32>
    %c1_150 = arith.constant 1 : index
    %c0_151 = arith.constant 0 : index
    %134 = tpu.strided_load %arg6[%c1_150, %c0_151] {strides = array<i32: 2, 1>} : memref<16x8xf32, #tpu.memory_space<vmem>>, vector<8x8xf32>
    %135 = tpu.transpose %134, [1, 0] : vector<8x8xf32> -> vector<8x8xf32>
    %136 = arith.addf %125, %127 : vector<8x8xf32>
    %137 = arith.addf %136, %133 : vector<8x8xf32>
    %138 = arith.addf %137, %135 : vector<8x8xf32>
    %cst_152 = arith.constant 2.500000e-01 : f32
    %139 = vector.broadcast %cst_152 : f32 to vector<8x8xf32>
    %140 = arith.mulf %138, %139 : vector<8x8xf32>
    %c0_153 = arith.constant 0 : index
    %c0_154 = arith.constant 0 : index
    %c3_155 = arith.constant 3 : index
    %c0_156 = arith.constant 0 : index
    %c0_157 = arith.constant 0 : index
    %141 = vector.load %arg5[%c0_153, %c0_154, %c3_155, %c0_156, %c0_157] : memref<1x5x4x8x8xf32, #tpu.memory_space<vmem>>, vector<1x1x1x8x8xf32>
    %142 = vector.shape_cast %141 : vector<1x1x1x8x8xf32> to vector<8x8xf32>
    %143 = vector.shape_cast %140 : vector<8x8xf32> to vector<1x1x1x8x8xf32>
    tpu.vector_store %arg5[%c0_153, %c0_154, %c3_155, %c0_156, %c0_157], %143 {strides = array<i32>} : memref<1x5x4x8x8xf32, #tpu.memory_space<vmem>>, vector<1x1x1x8x8xf32>,
    %144 = arith.subf %125, %140 : vector<8x8xf32>
    %c0_158 = arith.constant 0 : index
    %c1_159 = arith.constant 1 : index
    %c3_160 = arith.constant 3 : index
    %c0_161 = arith.constant 0 : index
    %c0_162 = arith.constant 0 : index
    %145 = vector.load %arg5[%c0_158, %c1_159, %c3_160, %c0_161, %c0_162] : memref<1x5x4x8x8xf32, #tpu.memory_space<vmem>>, vector<1x1x1x8x8xf32>
    %146 = vector.shape_cast %145 : vector<1x1x1x8x8xf32> to vector<8x8xf32>
    %147 = vector.shape_cast %144 : vector<8x8xf32> to vector<1x1x1x8x8xf32>
    tpu.vector_store %arg5[%c0_158, %c1_159, %c3_160, %c0_161, %c0_162], %147 {strides = array<i32>} : memref<1x5x4x8x8xf32, #tpu.memory_space<vmem>>, vector<1x1x1x8x8xf32>,
    %148 = arith.subf %127, %140 : vector<8x8xf32>
    %c0_163 = arith.constant 0 : index
    %c2_164 = arith.constant 2 : index
    %c3_165 = arith.constant 3 : index
    %c0_166 = arith.constant 0 : index
    %c0_167 = arith.constant 0 : index
    %149 = vector.load %arg5[%c0_163, %c2_164, %c3_165, %c0_166, %c0_167] : memref<1x5x4x8x8xf32, #tpu.memory_space<vmem>>, vector<1x1x1x8x8xf32>
    %150 = vector.shape_cast %149 : vector<1x1x1x8x8xf32> to vector<8x8xf32>
    %151 = vector.shape_cast %148 : vector<8x8xf32> to vector<1x1x1x8x8xf32>
    tpu.vector_store %arg5[%c0_163, %c2_164, %c3_165, %c0_166, %c0_167], %151 {strides = array<i32>} : memref<1x5x4x8x8xf32, #tpu.memory_space<vmem>>, vector<1x1x1x8x8xf32>,
    %152 = arith.subf %133, %140 : vector<8x8xf32>
    %c0_168 = arith.constant 0 : index
    %c3_169 = arith.constant 3 : index
    %c3_170 = arith.constant 3 : index
    %c0_171 = arith.constant 0 : index
    %c0_172 = arith.constant 0 : index
    %153 = vector.load %arg5[%c0_168, %c3_169, %c3_170, %c0_171, %c0_172] : memref<1x5x4x8x8xf32, #tpu.memory_space<vmem>>, vector<1x1x1x8x8xf32>
    %154 = vector.shape_cast %153 : vector<1x1x1x8x8xf32> to vector<8x8xf32>
    %155 = vector.shape_cast %152 : vector<8x8xf32> to vector<1x1x1x8x8xf32>
    tpu.vector_store %arg5[%c0_168, %c3_169, %c3_170, %c0_171, %c0_172], %155 {strides = array<i32>} : memref<1x5x4x8x8xf32, #tpu.memory_space<vmem>>, vector<1x1x1x8x8xf32>,
    %156 = arith.subf %135, %140 : vector<8x8xf32>
    %c0_173 = arith.constant 0 : index
    %c4_174 = arith.constant 4 : index
    %c3_175 = arith.constant 3 : index
    %c0_176 = arith.constant 0 : index
    %c0_177 = arith.constant 0 : index
    %157 = vector.load %arg5[%c0_173, %c4_174, %c3_175, %c0_176, %c0_177] : memref<1x5x4x8x8xf32, #tpu.memory_space<vmem>>, vector<1x1x1x8x8xf32>
    %158 = vector.shape_cast %157 : vector<1x1x1x8x8xf32> to vector<8x8xf32>
    %159 = vector.shape_cast %156 : vector<8x8xf32> to vector<1x1x1x8x8xf32>
    tpu.vector_store %arg5[%c0_173, %c4_174, %c3_175, %c0_176, %c0_177], %159 {strides = array<i32>} : memref<1x5x4x8x8xf32, #tpu.memory_space<vmem>>, vector<1x1x1x8x8xf32>,
    return
  }
  func.func @transform_0(%arg0: i32, %arg1: i32, %arg2: i32, %arg3: i32) -> (i32, i32, i32, i32) {
    %c0_i32 = arith.constant 0 : i32
    return %arg0, %arg1, %arg2, %arg3 : i32, i32, i32, i32
  }
  func.func @transform_1(%arg0: i32, %arg1: i32, %arg2: i32, %arg3: i32) -> (i32, i32, i32, i32, i32) {
    %c0_i32 = arith.constant 0 : i32
    %c0_i32_0 = arith.constant 0 : i32
    return %arg0, %c0_i32, %arg1, %arg2, %arg3 : i32, i32, i32, i32, i32
  }
}

module attributes {stable_mosaic.version = 11 : i64} {
  func.func @kernel(%arg0: i32, %arg1: i32, %arg2: memref<1x4x256xf32, #tpu.memory_space<vmem>>, %arg3: memref<1x5x256xf32, #tpu.memory_space<vmem>>) attributes {dimension_semantics = [#tpu.dimension_semantics<parallel>, #tpu.dimension_semantics<parallel>], iteration_bounds = array<i64: 2, 1>, scalar_prefetch = 0 : i64, scratch_operands = 0 : i64, tpu.core_type = #tpu.core_type<tc>, window_params = [{transform_indices = @transform_0, window_bounds = array<i64: 1, 4, 256>}, {transform_indices = @transform_1, window_bounds = array<i64: 1, 5, 256>}]} {
    %c0 = arith.constant 0 : index
    %c0_0 = arith.constant 0 : index
    %c0_1 = arith.constant 0 : index
    %0 = vector.load %arg2[%c0, %c0_0, %c0_1] : memref<1x4x256xf32, #tpu.memory_space<vmem>>, vector<1x4x256xf32>
    %cst = arith.constant dense<0.000000e+00> : vector<1x256xf32>
    %1 = vector.multi_reduction <add>, %0, %cst [1] : vector<1x4x256xf32> to vector<1x256xf32>
    %2 = vector.shape_cast %1 : vector<1x256xf32> to vector<1x1x256xf32>
    %cst_2 = arith.constant 2.500000e-01 : f32
    %3 = vector.broadcast %cst_2 : f32 to vector<1x1x256xf32>
    %4 = arith.mulf %2, %3 : vector<1x1x256xf32>
    %c0_3 = arith.constant 0 : index
    %c0_4 = arith.constant 0 : index
    %c0_5 = arith.constant 0 : index
    %5 = vector.load %arg3[%c0_3, %c0_4, %c0_5] : memref<1x5x256xf32, #tpu.memory_space<vmem>>, vector<1x1x256xf32>
    tpu.vector_store %arg3[%c0_3, %c0_4, %c0_5], %4 {strides = array<i32>} : memref<1x5x256xf32, #tpu.memory_space<vmem>>, vector<1x1x256xf32>,
    %6 = vector.broadcast %4 : vector<1x1x256xf32> to vector<1x4x256xf32>
    %7 = arith.subf %0, %6 : vector<1x4x256xf32>
    %c0_6 = arith.constant 0 : index
    %c1 = arith.constant 1 : index
    %c0_7 = arith.constant 0 : index
    %8 = vector.load %arg3[%c0_6, %c1, %c0_7] : memref<1x5x256xf32, #tpu.memory_space<vmem>>, vector<1x4x256xf32>
    tpu.vector_store %arg3[%c0_6, %c1, %c0_7], %7 {strides = array<i32>} : memref<1x5x256xf32, #tpu.memory_space<vmem>>, vector<1x4x256xf32>,
    return
  }
  func.func @transform_0(%arg0: i32, %arg1: i32) -> (i32, i32, i32) {
    %c0_i32 = arith.constant 0 : i32
    %c0_i32_0 = arith.constant 0 : i32
    return %arg0, %c0_i32, %arg1 : i32, i32, i32
  }
  func.func @transform_1(%arg0: i32, %arg1: i32) -> (i32, i32, i32) {
    %c0_i32 = arith.constant 0 : i32
    %c0_i32_0 = arith.constant 0 : i32
    return %arg0, %c0_i32, %arg1 : i32, i32, i32
  }
}

</mosaic_0001>

<llo_original>
// kernel: tpu_custom_call.1
$region0: #{tpu_custom_call.1}
  #allocation0 [shape = 'u32[]', space=smem, size = 0x4, offset = 0x4, fixed_abs, tag = 'smem constant byte address 0x4 - core index']
  #allocation1 [shape = 'u32[144,128]{1,0:T(1,128)}', space=vmem, size = 0x12000, scoped, tag = 'internal scratch']
  #allocation2 [shape = 'f32[16,8]{1,0:T(8,128)}', space=vmem, size = 0x2000, scoped, tag = 'scratch operand']
  %s0 = inlined_call_operand.hbm [shape: f32[2,4,16,16], index: 0, kind: input, shape index: {}]
  %s1 = inlined_call_operand.hbm [shape: f32[2,5,4,8,8], index: 1, kind: output, shape index: {}]
  %s2 = sld [smem:[#allocation0]]
  $region41: #{tpu_custom_call.1} parent=0
    _
  %s4 = ssub.s32 1, %s2
  %s5 = scalar_select 0, %s4, %s2
  $region1: #{tpu_custom_call.1} parent=0
    #allocation3 [shape = 'u8[65536]{0}', space=vmem, size = 0x10000, scoped, tag = 'input window, operand 0']
    #allocation4 [shape = 's32[2]{0}', space=sflag, size = 0x8, scoped, tag = 'scoped memory for tpu_custom_call.1']
    #allocation5 [shape = 's32[2]{0}', space=sflag, size = 0x8, scoped, tag = 'scoped memory for tpu_custom_call.1']
    #allocation6 [shape = 'u8[163840]{0}', space=vmem, size = 0x28000, scoped, tag = 'output window, operand 0']
    %6 = vsyncpa [#allocation4], 0
    %s7 = scalar_lea.sflag [#allocation4], 1
    %8 = vsyncpa %s7, 0
    %9 = vsyncpa [#allocation5], 0
    %s10 = scalar_lea.sflag [#allocation5], 1
    %11 = vsyncpa %s10, 0
    loop: start=0, step=1, limit=4
    $region2: #{tpu_custom_call.1} parent=1 // loop_pre_header
      _
    $region3: #{tpu_custom_call.1} parent=1 // loop_header
      %s13 = sphi 0, %s17
      %p14 = scmp.ge.s32.totalorder %s13, 4
      %s20 = sphi 0, %s46
      %s21 = sphi 0, %s42
      %s22 = sphi 0, %s38
      %s23 = sphi 0, %s34
      %s24 = sphi 0, %s20
      %s25 = sphi 0, %s21
      %s26 = sphi 0, %s22
      %s27 = sphi 0, %s23
      %s28 = sphi 0, %s24
      %s29 = sphi 0, %s25
      %s30 = sphi 0, %s26
      %s31 = sphi 0, %s27
      %s55 = sphi 0, %s57
      %s58 = sphi 0, %s55
      %s59 = sphi 0, %s58
      %s75 = sphi 0, %s59
      %s87 = sphi 0, %s89
      %s90 = sphi 0, %s87
      %s91 = sphi 0, %s90
      %s107 = sphi 0, %s91
    $region4: #{tpu_custom_call.1} parent=1 // loop_header_branch
      %16 = sbr.rel (%p14) target = $region8
    $region5: #{tpu_custom_call.1} parent=1 // loop_body
      %s18 = ssub.s32 %s13, 1
      %s19 = ssub.s32 %s13, 2
      %s32 = sadd.s32 1, %s23
      %p33 = scmp.ge.s32.totalorder %s32, 1
      %s34 = scalar_select %p33, 0, %s32
      %s35 = sadd.s32 1, %s22
      %s36 = scalar_select %p33, %s35, %s22
      %p37 = scmp.ge.s32.totalorder %s36, 1
      %s38 = scalar_select %p37, 0, %s36
      %s39 = sadd.s32 1, %s21
      %s40 = scalar_select %p37, %s39, %s21
      %p41 = scmp.ge.s32.totalorder %s40, 1
      %s42 = scalar_select %p41, 0, %s40
      %s43 = sadd.s32 1, %s20
      %s44 = scalar_select %p41, %s43, %s20
      %p45 = scmp.ge.s32.totalorder %s44, 2
      %s46 = scalar_select %p45, 0, %s44
      %s47 = ssub.s32 %s20, %s46
      %s48 = ssub.s32 %s21, %s42
      %s49 = sor.u32 %s47, %s48
      %s50 = ssub.s32 %s22, %s38
      %s51 = sor.u32 %s49, %s50
      %s52 = ssub.s32 %s23, %s34
      %s53 = sor.u32 %s51, %s52
      %p54 = scmp.eq.s32.totalorder %s53, 0
      %s56 = sadd.s32 %s55, 1
      %s57 = scalar_select %p54, %s55, %s56
      %p60 = pneg %p54
      %p61 = scmp.eq.s32.totalorder %s13, 1
      %p62 = por %p60, %p61
      %p63 = scmp.ne.s32.totalorder %s55, %s58
      %p64 = scmp.eq.s32.totalorder %s13, 0
      %p65 = por %p63, %p64
      %p66 = scmp.ne.s32.totalorder %s55, %s58
      %p67 = scmp.eq.s32.totalorder %s18, 1
      %p68 = por %p66, %p67
      %p69 = scmp.ne.s32.totalorder %s58, %s59
      %p70 = scmp.eq.s32.totalorder %s18, 0
      %p71 = por %p69, %p70
      %p72 = scmp.ne.s32.totalorder %s58, %s59
      %p73 = scmp.eq.s32.totalorder %s19, 1
      %p74 = por %p72, %p73
      %p76 = scmp.ne.s32.totalorder %s59, %s75
      %p77 = scmp.eq.s32.totalorder %s19, 0
      %p78 = por %p76, %p77
      %s79 = ssub.s32 %s20, %s46
      %s80 = ssub.s32 %s21, %s42
      %s81 = sor.u32 %s79, %s80
      %s82 = ssub.s32 %s22, %s38
      %s83 = sor.u32 %s81, %s82
      %s84 = ssub.s32 %s23, %s34
      %s85 = sor.u32 %s83, %s84
      %p86 = scmp.eq.s32.totalorder %s85, 0
      %s88 = sadd.s32 %s87, 1
      %s89 = scalar_select %p86, %s87, %s88
      %p92 = pneg %p86
      %p93 = scmp.eq.s32.totalorder %s13, 1
      %p94 = por %p92, %p93
      %p95 = scmp.ne.s32.totalorder %s87, %s90
      %p96 = scmp.eq.s32.totalorder %s13, 0
      %p97 = por %p95, %p96
      %p98 = scmp.ne.s32.totalorder %s87, %s90
      %p99 = scmp.eq.s32.totalorder %s18, 1
      %p100 = por %p98, %p99
      %p101 = scmp.ne.s32.totalorder %s90, %s91
      %p102 = scmp.eq.s32.totalorder %s18, 0
      %p103 = por %p101, %p102
      %p104 = scmp.ne.s32.totalorder %s90, %s91
      %p105 = scmp.eq.s32.totalorder %s19, 1
      %p106 = por %p104, %p105
      %p108 = scmp.ne.s32.totalorder %s91, %s107
      %p109 = scmp.eq.s32.totalorder %s19, 0
      %p110 = por %p108, %p109
      %p111 = scmp.le.s32.totalorder 1, %s13
      %p112 = scmp.lt.s32.totalorder %s13, 3
      %p113 = pnand %p111, %p112
      %p114 = pneg %p113
      // Predicated region
      $region9: #{tpu_custom_call.1} parent=5 // pred_check
        _
      $region10: #{tpu_custom_call.1} parent=5 // pred_check_branch
        %116 = sbr.rel (%p113) target = $region12
      $region11: #{tpu_custom_call.1} parent=5 // pred_region
        %s117 = ssub.s32 %s13, 1
      $region12: #{tpu_custom_call.1} parent=5 // pred_fallthru
        _
      %p118 = scmp.lt.s32.totalorder %s13, 2
      // Predicated region
      $region13: #{tpu_custom_call.1} parent=5 // pred_check
        %p119 = pneg %p118
      $region14: #{tpu_custom_call.1} parent=5 // pred_check_branch
        %121 = sbr.rel (%p119) target = $region16
      $region15: #{tpu_custom_call.1} parent=5 // pred_region
        // Predicated region
        $region17: #{tpu_custom_call.1} parent=15 // pred_check
          %p122 = pneg %p65
        $region18: #{tpu_custom_call.1} parent=15 // pred_check_branch
          %124 = sbr.rel (%p122) target = $region20
        $region19: #{tpu_custom_call.1} parent=15 // pred_region
          %s125 = sand.u32 %s55, 1
          %s126 = scalar_lea.sflag [#allocation4], %s125
          %s127 = sand.u32 %s55, 1
          %s128 = smul.addr %s127, 64
          %s129 = scalar_lea.vmem [#allocation3], %s128
          %s130 = smul.u32 4, %s21
          %s131 = smul.u32 2, %s22
          %s133 = ssub.s32 1024, 1024
          %134 = vsyncadd %s126, %s133
          %s135 = sadd.s32 %s23, %s131
          %s136 = smul.addr %s130, 2
          %s137 = sadd.s32 %s135, %s136
          %s138 = smul.addr %s20, 8
          %s139 = sadd.s32 %s137, %s138
          %s140 = smul.addr %s139, 128
          %s141 = scalar_lea.hbm %s0, %s140
          %s142 = sshll.u32 %s129, 4
          %s143 = int_to_ptr.vmem [resolvable:$true] %s142
          %148 = dma.hbm_to_vmem [thread:$0]  %s141, 1024, %s143, %s126, 128, 128, 8
        $region20: #{tpu_custom_call.1} parent=15 // pred_fallthru
          _
      $region16: #{tpu_custom_call.1} parent=5 // pred_fallthru
        _
      %p149 = scmp.le.s32.totalorder 1, %s13
      %p150 = scmp.lt.s32.totalorder %s13, 3
      %p151 = pnand %p149, %p150
      %p152 = pneg %p151
      // Predicated region
      $region21: #{tpu_custom_call.1} parent=5 // pred_check
        _
      $region22: #{tpu_custom_call.1} parent=5 // pred_check_branch
        %154 = sbr.rel (%p151) target = $region24
      $region23: #{tpu_custom_call.1} parent=5 // pred_region
        %s155 = ssub.s32 %s13, 1
        %s156 = sand.u32 %s58, 1
        %s157 = scalar_lea.sflag [#allocation4], %s156
        %s158 = sand.u32 %s58, 1
        %s159 = smul.addr %s158, 64
        %s160 = scalar_lea.vmem [#allocation3], %s159
        // Predicated region
        $region25: #{tpu_custom_call.1} parent=23 // pred_check
          %p161 = pneg %p71
        $region26: #{tpu_custom_call.1} parent=23 // pred_check_branch
          %163 = sbr.rel (%p161) target = $region28
        $region27: #{tpu_custom_call.1} parent=23 // pred_region
          %164 = dma.done %s157, 1024
        $region28: #{tpu_custom_call.1} parent=23 // pred_fallthru
          _
        %s165 = sand.u32 %s58, 1
        %s166 = scalar_lea.sflag [#allocation4], %s165
        %s167 = sand.u32 %s58, 1
        %s168 = smul.addr %s167, 64
        %s169 = scalar_lea.vmem [#allocation3], %s168
        %p170 = pneg %p71
        %p171 = pneg %p68
        %p172 = pneg %p103
        %p173 = pneg %p100
        %s174 = sand.u32 %s90, 1
        %s175 = scalar_lea.sflag [#allocation5], %s174
        %s176 = sand.u32 %s90, 1
        %s177 = smul.addr %s176, 160
        %s178 = scalar_lea.vmem [#allocation6], %s177
        %s179 = smul.u32 4, %s25
        %s180 = smul.u32 2, %s26
        %s181 = smul.u32 4, %s25
        %v182 = vld [vmem:[%s160] ss:$2 sm:$0xff]
        %183 = vxpose.xlu0.b32.start [1/16] %v182, 128
        %184 = vxpose.xlu0.b32.cont [2/16] 0.0, 128
        %185 = vxpose.xlu0.b32.cont [3/16] 0.0, 128
        %186 = vxpose.xlu0.b32.cont [4/16] 0.0, 128
        %187 = vxpose.xlu0.b32.cont [5/16] 0.0, 128
        %188 = vxpose.xlu0.b32.cont [6/16] 0.0, 128
        %189 = vxpose.xlu0.b32.cont [7/16] 0.0, 128
        %190 = vxpose.xlu0.b32.cont [8/16] 0.0, 128
        %191 = vxpose.xlu0.b32.cont [9/16] 0.0, 128
        %192 = vxpose.xlu0.b32.cont [10/16] 0.0, 128
        %193 = vxpose.xlu0.b32.cont [11/16] 0.0, 128
        %194 = vxpose.xlu0.b32.cont [12/16] 0.0, 128
        %195 = vxpose.xlu0.b32.cont [13/16] 0.0, 128
        %196 = vxpose.xlu0.b32.cont [14/16] 0.0, 128
        %197 = vxpose.xlu0.b32.cont [15/16] 0.0, 128
        %198 = vxpose.xlu0.b32.end [16/16] 0.0, 128
        %v199 = vpop.trf.xlu0
        %v200 = vpop.trf.xlu0
        %v201 = vpop.trf.xlu0
        %v202 = vpop.trf.xlu0
        %v203 = vpop.trf.xlu0
        %v204 = vpop.trf.xlu0
        %v205 = vpop.trf.xlu0
        %v206 = vpop.trf.xlu0
        %v207 = vpop.trf.xlu0
        %v208 = vpop.trf.xlu0
        %v209 = vpop.trf.xlu0
        %v210 = vpop.trf.xlu0
        %v211 = vpop.trf.xlu0
        %v212 = vpop.trf.xlu0
        %v213 = vpop.trf.xlu0
        %v214 = vpop.trf.xlu0
        %vm215 = vcmask 64512
        %216 = vst.msk [vmem:[#allocation2] sm:$0xff] %vm215, %v199
        %217 = vst.msk [vmem:[#allocation2 + $0x8] sm:$0xff] %vm215, %v200
        %v218 = vld [vmem:[#allocation2] ss:$2 sm:$0xff]
        %219 = vxpose.xlu0.b32.start [1/16] %v218, 128
        %220 = vxpose.xlu0.b32.cont [2/16] 0.0, 128
        %221 = vxpose.xlu0.b32.cont [3/16] 0.0, 128
        %222 = vxpose.xlu0.b32.cont [4/16] 0.0, 128
        %223 = vxpose.xlu0.b32.cont [5/16] 0.0, 128
        %224 = vxpose.xlu0.b32.cont [6/16] 0.0, 128
        %225 = vxpose.xlu0.b32.cont [7/16] 0.0, 128
        %226 = vxpose.xlu0.b32.cont [8/16] 0.0, 128
        %227 = vxpose.xlu0.b32.cont [9/16] 0.0, 128
        %228 = vxpose.xlu0.b32.cont [10/16] 0.0, 128
        %229 = vxpose.xlu0.b32.cont [11/16] 0.0, 128
        %230 = vxpose.xlu0.b32.cont [12/16] 0.0, 128
        %231 = vxpose.xlu0.b32.cont [13/16] 0.0, 128
        %232 = vxpose.xlu0.b32.cont [14/16] 0.0, 128
        %233 = vxpose.xlu0.b32.cont [15/16] 0.0, 128
        %234 = vxpose.xlu0.b32.end [16/16] 0.0, 128
        %v235 = vpop.trf.xlu0
        %v236 = vpop.trf.xlu0
        %v237 = vpop.trf.xlu0
        %v238 = vpop.trf.xlu0
        %v239 = vpop.trf.xlu0
        %v240 = vpop.trf.xlu0
        %v241 = vpop.trf.xlu0
        %v242 = vpop.trf.xlu0
        %v243 = vpop.trf.xlu0
        %v244 = vpop.trf.xlu0
        %v245 = vpop.trf.xlu0
        %v246 = vpop.trf.xlu0
        %v247 = vpop.trf.xlu0
        %v248 = vpop.trf.xlu0
        %v249 = vpop.trf.xlu0
        %v250 = vpop.trf.xlu0
        %s251 = scalar_lea.vmem [#allocation2], 1
        %v252 = vld [vmem:[%s251] ss:$2 sm:$0xff]
        %253 = vxpose.xlu0.b32.start [1/16] %v252, 128
        %254 = vxpose.xlu0.b32.cont [2/16] 0.0, 128
        %255 = vxpose.xlu0.b32.cont [3/16] 0.0, 128
        %256 = vxpose.xlu0.b32.cont [4/16] 0.0, 128
        %257 = vxpose.xlu0.b32.cont [5/16] 0.0, 128
        %258 = vxpose.xlu0.b32.cont [6/16] 0.0, 128
        %259 = vxpose.xlu0.b32.cont [7/16] 0.0, 128
        %260 = vxpose.xlu0.b32.cont [8/16] 0.0, 128
        %261 = vxpose.xlu0.b32.cont [9/16] 0.0, 128
        %262 = vxpose.xlu0.b32.cont [10/16] 0.0, 128
        %263 = vxpose.xlu0.b32.cont [11/16] 0.0, 128
        %264 = vxpose.xlu0.b32.cont [12/16] 0.0, 128
        %265 = vxpose.xlu0.b32.cont [13/16] 0.0, 128
        %266 = vxpose.xlu0.b32.cont [14/16] 0.0, 128
        %267 = vxpose.xlu0.b32.cont [15/16] 0.0, 128
        %268 = vxpose.xlu0.b32.end [16/16] 0.0, 128
        %v269 = vpop.trf.xlu0
        %v270 = vpop.trf.xlu0
        %v271 = vpop.trf.xlu0
        %v272 = vpop.trf.xlu0
        %v273 = vpop.trf.xlu0
        %v274 = vpop.trf.xlu0
        %v275 = vpop.trf.xlu0
        %v276 = vpop.trf.xlu0
        %v277 = vpop.trf.xlu0
        %v278 = vpop.trf.xlu0
        %v279 = vpop.trf.xlu0
        %v280 = vpop.trf.xlu0
        %v281 = vpop.trf.xlu0
        %v282 = vpop.trf.xlu0
        %v283 = vpop.trf.xlu0
        %v284 = vpop.trf.xlu0
        %s285 = scalar_lea.vmem %s160, 1 [#allocation3]
        %v286 = vld [vmem:[%s285] ss:$2 sm:$0xff]
        %287 = vxpose.xlu0.b32.start [1/16] %v286, 128
        %288 = vxpose.xlu0.b32.cont [2/16] 0.0, 128
        %289 = vxpose.xlu0.b32.cont [3/16] 0.0, 128
        %290 = vxpose.xlu0.b32.cont [4/16] 0.0, 128
        %291 = vxpose.xlu0.b32.cont [5/16] 0.0, 128
        %292 = vxpose.xlu0.b32.cont [6/16] 0.0, 128
        %293 = vxpose.xlu0.b32.cont [7/16] 0.0, 128
        %294 = vxpose.xlu0.b32.cont [8/16] 0.0, 128
        %295 = vxpose.xlu0.b32.cont [9/16] 0.0, 128
        %296 = vxpose.xlu0.b32.cont [10/16] 0.0, 128
        %297 = vxpose.xlu0.b32.cont [11/16] 0.0, 128
        %298 = vxpose.xlu0.b32.cont [12/16] 0.0, 128
        %299 = vxpose.xlu0.b32.cont [13/16] 0.0, 128
        %300 = vxpose.xlu0.b32.cont [14/16] 0.0, 128
        %301 = vxpose.xlu0.b32.cont [15/16] 0.0, 128
        %302 = vxpose.xlu0.b32.end [16/16] 0.0, 128
        %v303 = vpop.trf.xlu0
        %v304 = vpop.trf.xlu0
        %v305 = vpop.trf.xlu0
        %v306 = vpop.trf.xlu0
        %v307 = vpop.trf.xlu0
        %v308 = vpop.trf.xlu0
        %v309 = vpop.trf.xlu0
        %v310 = vpop.trf.xlu0
        %v311 = vpop.trf.xlu0
        %v312 = vpop.trf.xlu0
        %v313 = vpop.trf.xlu0
        %v314 = vpop.trf.xlu0
        %v315 = vpop.trf.xlu0
        %v316 = vpop.trf.xlu0
        %v317 = vpop.trf.xlu0
        %v318 = vpop.trf.xlu0
        %319 = vst.msk [vmem:[#allocation2] sm:$0xff] %vm215, %v303
        %320 = vst.msk [vmem:[#allocation2 + $0x8] sm:$0xff] %vm215, %v304
        %v321 = vld [vmem:[#allocation2] ss:$2 sm:$0xff]
        %322 = vxpose.xlu0.b32.start [1/16] %v321, 128
        %323 = vxpose.xlu0.b32.cont [2/16] 0.0, 128
        %324 = vxpose.xlu0.b32.cont [3/16] 0.0, 128
        %325 = vxpose.xlu0.b32.cont [4/16] 0.0, 128
        %326 = vxpose.xlu0.b32.cont [5/16] 0.0, 128
        %327 = vxpose.xlu0.b32.cont [6/16] 0.0, 128
        %328 = vxpose.xlu0.b32.cont [7/16] 0.0, 128
        %329 = vxpose.xlu0.b32.cont [8/16] 0.0, 128
        %330 = vxpose.xlu0.b32.cont [9/16] 0.0, 128
        %331 = vxpose.xlu0.b32.cont [10/16] 0.0, 128
        %332 = vxpose.xlu0.b32.cont [11/16] 0.0, 128
        %333 = vxpose.xlu0.b32.cont [12/16] 0.0, 128
        %334 = vxpose.xlu0.b32.cont [13/16] 0.0, 128
        %335 = vxpose.xlu0.b32.cont [14/16] 0.0, 128
        %336 = vxpose.xlu0.b32.cont [15/16] 0.0, 128
        %337 = vxpose.xlu0.b32.end [16/16] 0.0, 128
        %v338 = vpop.trf.xlu0
        %v339 = vpop.trf.xlu0
        %v340 = vpop.trf.xlu0
        %v341 = vpop.trf.xlu0
        %v342 = vpop.trf.xlu0
        %v343 = vpop.trf.xlu0
        %v344 = vpop.trf.xlu0
        %v345 = vpop.trf.xlu0
        %v346 = vpop.trf.xlu0
        %v347 = vpop.trf.xlu0
        %v348 = vpop.trf.xlu0
        %v349 = vpop.trf.xlu0
        %v350 = vpop.trf.xlu0
        %v351 = vpop.trf.xlu0
        %v352 = vpop.trf.xlu0
        %v353 = vpop.trf.xlu0
        %v354 = vld [vmem:[%s251] ss:$2 sm:$0xff]
        %355 = vxpose.xlu0.b32.start [1/16] %v354, 128
        %356 = vxpose.xlu0.b32.cont [2/16] 0.0, 128
        %357 = vxpose.xlu0.b32.cont [3/16] 0.0, 128
        %358 = vxpose.xlu0.b32.cont [4/16] 0.0, 128
        %359 = vxpose.xlu0.b32.cont [5/16] 0.0, 128
        %360 = vxpose.xlu0.b32.cont [6/16] 0.0, 128
        %361 = vxpose.xlu0.b32.cont [7/16] 0.0, 128
        %362 = vxpose.xlu0.b32.cont [8/16] 0.0, 128
        %363 = vxpose.xlu0.b32.cont [9/16] 0.0, 128
        %364 = vxpose.xlu0.b32.cont [10/16] 0.0, 128
        %365 = vxpose.xlu0.b32.cont [11/16] 0.0, 128
        %366 = vxpose.xlu0.b32.cont [12/16] 0.0, 128
        %367 = vxpose.xlu0.b32.cont [13/16] 0.0, 128
        %368 = vxpose.xlu0.b32.cont [14/16] 0.0, 128
        %369 = vxpose.xlu0.b32.cont [15/16] 0.0, 128
        %370 = vxpose.xlu0.b32.end [16/16] 0.0, 128
        %v371 = vpop.trf.xlu0
        %v372 = vpop.trf.xlu0
        %v373 = vpop.trf.xlu0
        %v374 = vpop.trf.xlu0
        %v375 = vpop.trf.xlu0
        %v376 = vpop.trf.xlu0
        %v377 = vpop.trf.xlu0
        %v378 = vpop.trf.xlu0
        %v379 = vpop.trf.xlu0
        %v380 = vpop.trf.xlu0
        %v381 = vpop.trf.xlu0
        %v382 = vpop.trf.xlu0
        %v383 = vpop.trf.xlu0
        %v384 = vpop.trf.xlu0
        %v385 = vpop.trf.xlu0
        %v386 = vpop.trf.xlu0
        %v387 = vadd.f32 %v235, %v269
        %v388 = vadd.f32 %v387, %v338
        %v389 = vadd.f32 %v388, %v371
        %v390 = vmul.f32 %v389, 0.25
        %391 = vst.msk [vmem:[%s178] sm:$0xff] %vm215, %v390
        %v392 = vsub.f32 %v235, %v390
        %s393 = scalar_lea.vmem %s178, 32 [#allocation6]
        %394 = vst.msk [vmem:[%s393] sm:$0xff] %vm215, %v392
        %v395 = vsub.f32 %v269, %v390
        %s396 = scalar_lea.vmem %s178, 64 [#allocation6]
        %397 = vst.msk [vmem:[%s396] sm:$0xff] %vm215, %v395
        %v398 = vsub.f32 %v338, %v390
        %s399 = scalar_lea.vmem %s178, 96 [#allocation6]
        %400 = vst.msk [vmem:[%s399] sm:$0xff] %vm215, %v398
        %v401 = vsub.f32 %v371, %v390
        %s402 = scalar_lea.vmem %s178, 128 [#allocation6]
        %403 = vst.msk [vmem:[%s402] sm:$0xff] %vm215, %v401
        %s404 = scalar_lea.vmem %s160, 16 [#allocation3]
        %v405 = vld [vmem:[%s404] ss:$2 sm:$0xff]
        %406 = vxpose.xlu0.b32.start [1/16] %v405, 128
        %407 = vxpose.xlu0.b32.cont [2/16] 0.0, 128
        %408 = vxpose.xlu0.b32.cont [3/16] 0.0, 128
        %409 = vxpose.xlu0.b32.cont [4/16] 0.0, 128
        %410 = vxpose.xlu0.b32.cont [5/16] 0.0, 128
        %411 = vxpose.xlu0.b32.cont [6/16] 0.0, 128
        %412 = vxpose.xlu0.b32.cont [7/16] 0.0, 128
        %413 = vxpose.xlu0.b32.cont [8/16] 0.0, 128
        %414 = vxpose.xlu0.b32.cont [9/16] 0.0, 128
        %415 = vxpose.xlu0.b32.cont [10/16] 0.0, 128
        %416 = vxpose.xlu0.b32.cont [11/16] 0.0, 128
        %417 = vxpose.xlu0.b32.cont [12/16] 0.0, 128
        %418 = vxpose.xlu0.b32.cont [13/16] 0.0, 128
        %419 = vxpose.xlu0.b32.cont [14/16] 0.0, 128
        %420 = vxpose.xlu0.b32.cont [15/16] 0.0, 128
        %421 = vxpose.xlu0.b32.end [16/16] 0.0, 128
        %v422 = vpop.trf.xlu0
        %v423 = vpop.trf.xlu0
        %v424 = vpop.trf.xlu0
        %v425 = vpop.trf.xlu0
        %v426 = vpop.trf.xlu0
        %v427 = vpop.trf.xlu0
        %v428 = vpop.trf.xlu0
        %v429 = vpop.trf.xlu0
        %v430 = vpop.trf.xlu0
        %v431 = vpop.trf.xlu0
        %v432 = vpop.trf.xlu0
        %v433 = vpop.trf.xlu0
        %v434 = vpop.trf.xlu0
        %v435 = vpop.trf.xlu0
        %v436 = vpop.trf.xlu0
        %v437 = vpop.trf.xlu0
        %438 = vst.msk [vmem:[#allocation2] sm:$0xff] %vm215, %v422
        %439 = vst.msk [vmem:[#allocation2 + $0x8] sm:$0xff] %vm215, %v423
        %v440 = vld [vmem:[#allocation2] ss:$2 sm:$0xff]
        %441 = vxpose.xlu0.b32.start [1/16] %v440, 128
        %442 = vxpose.xlu0.b32.cont [2/16] 0.0, 128
        %443 = vxpose.xlu0.b32.cont [3/16] 0.0, 128
        %444 = vxpose.xlu0.b32.cont [4/16] 0.0, 128
        %445 = vxpose.xlu0.b32.cont [5/16] 0.0, 128
        %446 = vxpose.xlu0.b32.cont [6/16] 0.0, 128
        %447 = vxpose.xlu0.b32.cont [7/16] 0.0, 128
        %448 = vxpose.xlu0.b32.cont [8/16] 0.0, 128
        %449 = vxpose.xlu0.b32.cont [9/16] 0.0, 128
        %450 = vxpose.xlu0.b32.cont [10/16] 0.0, 128
        %451 = vxpose.xlu0.b32.cont [11/16] 0.0, 128
        %452 = vxpose.xlu0.b32.cont [12/16] 0.0, 128
        %453 = vxpose.xlu0.b32.cont [13/16] 0.0, 128
        %454 = vxpose.xlu0.b32.cont [14/16] 0.0, 128
        %455 = vxpose.xlu0.b32.cont [15/16] 0.0, 128
        %456 = vxpose.xlu0.b32.end [16/16] 0.0, 128
        %v457 = vpop.trf.xlu0
        %v458 = vpop.trf.xlu0
        %v459 = vpop.trf.xlu0
        %v460 = vpop.trf.xlu0
        %v461 = vpop.trf.xlu0
        %v462 = vpop.trf.xlu0
        %v463 = vpop.trf.xlu0
        %v464 = vpop.trf.xlu0
        %v465 = vpop.trf.xlu0
        %v466 = vpop.trf.xlu0
        %v467 = vpop.trf.xlu0
        %v468 = vpop.trf.xlu0
        %v469 = vpop.trf.xlu0
        %v470 = vpop.trf.xlu0
        %v471 = vpop.trf.xlu0
        %v472 = vpop.trf.xlu0
        %v473 = vld [vmem:[%s251] ss:$2 sm:$0xff]
        %474 = vxpose.xlu0.b32.start [1/16] %v473, 128
        %475 = vxpose.xlu0.b32.cont [2/16] 0.0, 128
        %476 = vxpose.xlu0.b32.cont [3/16] 0.0, 128
        %477 = vxpose.xlu0.b32.cont [4/16] 0.0, 128
        %478 = vxpose.xlu0.b32.cont [5/16] 0.0, 128
        %479 = vxpose.xlu0.b32.cont [6/16] 0.0, 128
        %480 = vxpose.xlu0.b32.cont [7/16] 0.0, 128
        %481 = vxpose.xlu0.b32.cont [8/16] 0.0, 128
        %482 = vxpose.xlu0.b32.cont [9/16] 0.0, 128
        %483 = vxpose.xlu0.b32.cont [10/16] 0.0, 128
        %484 = vxpose.xlu0.b32.cont [11/16] 0.0, 128
        %485 = vxpose.xlu0.b32.cont [12/16] 0.0, 128
        %486 = vxpose.xlu0.b32.cont [13/16] 0.0, 128
        %487 = vxpose.xlu0.b32.cont [14/16] 0.0, 128
        %488 = vxpose.xlu0.b32.cont [15/16] 0.0, 128
        %489 = vxpose.xlu0.b32.end [16/16] 0.0, 128
        %v490 = vpop.trf.xlu0
        %v491 = vpop.trf.xlu0
        %v492 = vpop.trf.xlu0
        %v493 = vpop.trf.xlu0
        %v494 = vpop.trf.xlu0
        %v495 = vpop.trf.xlu0
        %v496 = vpop.trf.xlu0
        %v497 = vpop.trf.xlu0
        %v498 = vpop.trf.xlu0
        %v499 = vpop.trf.xlu0
        %v500 = vpop.trf.xlu0
        %v501 = vpop.trf.xlu0
        %v502 = vpop.trf.xlu0
        %v503 = vpop.trf.xlu0
        %v504 = vpop.trf.xlu0
        %v505 = vpop.trf.xlu0
        %s506 = scalar_lea.vmem %s404, 1 [#allocation3]
        %v507 = vld [vmem:[%s506] ss:$2 sm:$0xff]
        %508 = vxpose.xlu0.b32.start [1/16] %v507, 128
        %509 = vxpose.xlu0.b32.cont [2/16] 0.0, 128
        %510 = vxpose.xlu0.b32.cont [3/16] 0.0, 128
        %511 = vxpose.xlu0.b32.cont [4/16] 0.0, 128
        %512 = vxpose.xlu0.b32.cont [5/16] 0.0, 128
        %513 = vxpose.xlu0.b32.cont [6/16] 0.0, 128
        %514 = vxpose.xlu0.b32.cont [7/16] 0.0, 128
        %515 = vxpose.xlu0.b32.cont [8/16] 0.0, 128
        %516 = vxpose.xlu0.b32.cont [9/16] 0.0, 128
        %517 = vxpose.xlu0.b32.cont [10/16] 0.0, 128
        %518 = vxpose.xlu0.b32.cont [11/16] 0.0, 128
        %519 = vxpose.xlu0.b32.cont [12/16] 0.0, 128
        %520 = vxpose.xlu0.b32.cont [13/16] 0.0, 128
        %521 = vxpose.xlu0.b32.cont [14/16] 0.0, 128
        %522 = vxpose.xlu0.b32.cont [15/16] 0.0, 128
        %523 = vxpose.xlu0.b32.end [16/16] 0.0, 128
        %v524 = vpop.trf.xlu0
        %v525 = vpop.trf.xlu0
        %v526 = vpop.trf.xlu0
        %v527 = vpop.trf.xlu0
        %v528 = vpop.trf.xlu0
        %v529 = vpop.trf.xlu0
        %v530 = vpop.trf.xlu0
        %v531 = vpop.trf.xlu0
        %v532 = vpop.trf.xlu0
        %v533 = vpop.trf.xlu0
        %v534 = vpop.trf.xlu0
        %v535 = vpop.trf.xlu0
        %v536 = vpop.trf.xlu0
        %v537 = vpop.trf.xlu0
        %v538 = vpop.trf.xlu0
        %v539 = vpop.trf.xlu0
        %540 = vst.msk [vmem:[#allocation2] sm:$0xff] %vm215, %v524
        %541 = vst.msk [vmem:[#allocation2 + $0x8] sm:$0xff] %vm215, %v525
        %v542 = vld [vmem:[#allocation2] ss:$2 sm:$0xff]
        %543 = vxpose.xlu0.b32.start [1/16] %v542, 128
        %544 = vxpose.xlu0.b32.cont [2/16] 0.0, 128
        %545 = vxpose.xlu0.b32.cont [3/16] 0.0, 128
        %546 = vxpose.xlu0.b32.cont [4/16] 0.0, 128
        %547 = vxpose.xlu0.b32.cont [5/16] 0.0, 128
        %548 = vxpose.xlu0.b32.cont [6/16] 0.0, 128
        %549 = vxpose.xlu0.b32.cont [7/16] 0.0, 128
        %550 = vxpose.xlu0.b32.cont [8/16] 0.0, 128
        %551 = vxpose.xlu0.b32.cont [9/16] 0.0, 128
        %552 = vxpose.xlu0.b32.cont [10/16] 0.0, 128
        %553 = vxpose.xlu0.b32.cont [11/16] 0.0, 128
        %554 = vxpose.xlu0.b32.cont [12/16] 0.0, 128
        %555 = vxpose.xlu0.b32.cont [13/16] 0.0, 128
        %556 = vxpose.xlu0.b32.cont [14/16] 0.0, 128
        %557 = vxpose.xlu0.b32.cont [15/16] 0.0, 128
        %558 = vxpose.xlu0.b32.end [16/16] 0.0, 128
        %v559 = vpop.trf.xlu0
        %v560 = vpop.trf.xlu0
        %v561 = vpop.trf.xlu0
        %v562 = vpop.trf.xlu0
        %v563 = vpop.trf.xlu0
        %v564 = vpop.trf.xlu0
        %v565 = vpop.trf.xlu0
        %v566 = vpop.trf.xlu0
        %v567 = vpop.trf.xlu0
        %v568 = vpop.trf.xlu0
        %v569 = vpop.trf.xlu0
        %v570 = vpop.trf.xlu0
        %v571 = vpop.trf.xlu0
        %v572 = vpop.trf.xlu0
        %v573 = vpop.trf.xlu0
        %v574 = vpop.trf.xlu0
        %v575 = vld [vmem:[%s251] ss:$2 sm:$0xff]
        %576 = vxpose.xlu0.b32.start [1/16] %v575, 128
        %577 = vxpose.xlu0.b32.cont [2/16] 0.0, 128
        %578 = vxpose.xlu0.b32.cont [3/16] 0.0, 128
        %579 = vxpose.xlu0.b32.cont [4/16] 0.0, 128
        %580 = vxpose.xlu0.b32.cont [5/16] 0.0, 128
        %581 = vxpose.xlu0.b32.cont [6/16] 0.0, 128
        %582 = vxpose.xlu0.b32.cont [7/16] 0.0, 128
        %583 = vxpose.xlu0.b32.cont [8/16] 0.0, 128
        %584 = vxpose.xlu0.b32.cont [9/16] 0.0, 128
        %585 = vxpose.xlu0.b32.cont [10/16] 0.0, 128
        %586 = vxpose.xlu0.b32.cont [11/16] 0.0, 128
        %587 = vxpose.xlu0.b32.cont [12/16] 0.0, 128
        %588 = vxpose.xlu0.b32.cont [13/16] 0.0, 128
        %589 = vxpose.xlu0.b32.cont [14/16] 0.0, 128
        %590 = vxpose.xlu0.b32.cont [15/16] 0.0, 128
        %591 = vxpose.xlu0.b32.end [16/16] 0.0, 128
        %v592 = vpop.trf.xlu0
        %v593 = vpop.trf.xlu0
        %v594 = vpop.trf.xlu0
        %v595 = vpop.trf.xlu0
        %v596 = vpop.trf.xlu0
        %v597 = vpop.trf.xlu0
        %v598 = vpop.trf.xlu0
        %v599 = vpop.trf.xlu0
        %v600 = vpop.trf.xlu0
        %v601 = vpop.trf.xlu0
        %v602 = vpop.trf.xlu0
        %v603 = vpop.trf.xlu0
        %v604 = vpop.trf.xlu0
        %v605 = vpop.trf.xlu0
        %v606 = vpop.trf.xlu0
        %v607 = vpop.trf.xlu0
        %v608 = vadd.f32 %v457, %v490
        %v609 = vadd.f32 %v608, %v559
        %v610 = vadd.f32 %v609, %v592
        %v611 = vmul.f32 %v610, 0.25
        %s612 = scalar_lea.vmem %s178, 8 [#allocation6]
        %613 = vst.msk [vmem:[%s612] sm:$0xff] %vm215, %v611
        %v614 = vsub.f32 %v457, %v611
        %s615 = scalar_lea.vmem %s178, 40 [#allocation6]
        %616 = vst.msk [vmem:[%s615] sm:$0xff] %vm215, %v614
        %v617 = vsub.f32 %v490, %v611
        %s618 = scalar_lea.vmem %s178, 72 [#allocation6]
        %619 = vst.msk [vmem:[%s618] sm:$0xff] %vm215, %v617
        %v620 = vsub.f32 %v559, %v611
        %s621 = scalar_lea.vmem %s178, 104 [#allocation6]
        %622 = vst.msk [vmem:[%s621] sm:$0xff] %vm215, %v620
        %v623 = vsub.f32 %v592, %v611
        %s624 = scalar_lea.vmem %s178, 136 [#allocation6]
        %625 = vst.msk [vmem:[%s624] sm:$0xff] %vm215, %v623
        %s626 = scalar_lea.vmem %s160, 32 [#allocation3]
        %v627 = vld [vmem:[%s626] ss:$2 sm:$0xff]
        %628 = vxpose.xlu0.b32.start [1/16] %v627, 128
        %629 = vxpose.xlu0.b32.cont [2/16] 0.0, 128
        %630 = vxpose.xlu0.b32.cont [3/16] 0.0, 128
        %631 = vxpose.xlu0.b32.cont [4/16] 0.0, 128
        %632 = vxpose.xlu0.b32.cont [5/16] 0.0, 128
        %633 = vxpose.xlu0.b32.cont [6/16] 0.0, 128
        %634 = vxpose.xlu0.b32.cont [7/16] 0.0, 128
        %635 = vxpose.xlu0.b32.cont [8/16] 0.0, 128
        %636 = vxpose.xlu0.b32.cont [9/16] 0.0, 128
        %637 = vxpose.xlu0.b32.cont [10/16] 0.0, 128
        %638 = vxpose.xlu0.b32.cont [11/16] 0.0, 128
        %639 = vxpose.xlu0.b32.cont [12/16] 0.0, 128
        %640 = vxpose.xlu0.b32.cont [13/16] 0.0, 128
        %641 = vxpose.xlu0.b32.cont [14/16] 0.0, 128
        %642 = vxpose.xlu0.b32.cont [15/16] 0.0, 128
        %643 = vxpose.xlu0.b32.end [16/16] 0.0, 128
        %v644 = vpop.trf.xlu0
        %v645 = vpop.trf.xlu0
        %v646 = vpop.trf.xlu0
        %v647 = vpop.trf.xlu0
        %v648 = vpop.trf.xlu0
        %v649 = vpop.trf.xlu0
        %v650 = vpop.trf.xlu0
        %v651 = vpop.trf.xlu0
        %v652 = vpop.trf.xlu0
        %v653 = vpop.trf.xlu0
        %v654 = vpop.trf.xlu0
        %v655 = vpop.trf.xlu0
        %v656 = vpop.trf.xlu0
        %v657 = vpop.trf.xlu0
        %v658 = vpop.trf.xlu0
        %v659 = vpop.trf.xlu0
        %660 = vst.msk [vmem:[#allocation2] sm:$0xff] %vm215, %v644
        %661 = vst.msk [vmem:[#allocation2 + $0x8] sm:$0xff] %vm215, %v645
        %v662 = vld [vmem:[#allocation2] ss:$2 sm:$0xff]
        %663 = vxpose.xlu0.b32.start [1/16] %v662, 128
        %664 = vxpose.xlu0.b32.cont [2/16] 0.0, 128
        %665 = vxpose.xlu0.b32.cont [3/16] 0.0, 128
        %666 = vxpose.xlu0.b32.cont [4/16] 0.0, 128
        %667 = vxpose.xlu0.b32.cont [5/16] 0.0, 128
        %668 = vxpose.xlu0.b32.cont [6/16] 0.0, 128
        %669 = vxpose.xlu0.b32.cont [7/16] 0.0, 128
        %670 = vxpose.xlu0.b32.cont [8/16] 0.0, 128
        %671 = vxpose.xlu0.b32.cont [9/16] 0.0, 128
        %672 = vxpose.xlu0.b32.cont [10/16] 0.0, 128
        %673 = vxpose.xlu0.b32.cont [11/16] 0.0, 128
        %674 = vxpose.xlu0.b32.cont [12/16] 0.0, 128
        %675 = vxpose.xlu0.b32.cont [13/16] 0.0, 128
        %676 = vxpose.xlu0.b32.cont [14/16] 0.0, 128
        %677 = vxpose.xlu0.b32.cont [15/16] 0.0, 128
        %678 = vxpose.xlu0.b32.end [16/16] 0.0, 128
        %v679 = vpop.trf.xlu0
        %v680 = vpop.trf.xlu0
        %v681 = vpop.trf.xlu0
        %v682 = vpop.trf.xlu0
        %v683 = vpop.trf.xlu0
        %v684 = vpop.trf.xlu0
        %v685 = vpop.trf.xlu0
        %v686 = vpop.trf.xlu0
        %v687 = vpop.trf.xlu0
        %v688 = vpop.trf.xlu0
        %v689 = vpop.trf.xlu0
        %v690 = vpop.trf.xlu0
        %v691 = vpop.trf.xlu0
        %v692 = vpop.trf.xlu0
        %v693 = vpop.trf.xlu0
        %v694 = vpop.trf.xlu0
        %v695 = vld [vmem:[%s251] ss:$2 sm:$0xff]
        %696 = vxpose.xlu0.b32.start [1/16] %v695, 128
        %697 = vxpose.xlu0.b32.cont [2/16] 0.0, 128
        %698 = vxpose.xlu0.b32.cont [3/16] 0.0, 128
        %699 = vxpose.xlu0.b32.cont [4/16] 0.0, 128
        %700 = vxpose.xlu0.b32.cont [5/16] 0.0, 128
        %701 = vxpose.xlu0.b32.cont [6/16] 0.0, 128
        %702 = vxpose.xlu0.b32.cont [7/16] 0.0, 128
        %703 = vxpose.xlu0.b32.cont [8/16] 0.0, 128
        %704 = vxpose.xlu0.b32.cont [9/16] 0.0, 128
        %705 = vxpose.xlu0.b32.cont [10/16] 0.0, 128
        %706 = vxpose.xlu0.b32.cont [11/16] 0.0, 128
        %707 = vxpose.xlu0.b32.cont [12/16] 0.0, 128
        %708 = vxpose.xlu0.b32.cont [13/16] 0.0, 128
        %709 = vxpose.xlu0.b32.cont [14/16] 0.0, 128
        %710 = vxpose.xlu0.b32.cont [15/16] 0.0, 128
        %711 = vxpose.xlu0.b32.end [16/16] 0.0, 128
        %v712 = vpop.trf.xlu0
        %v713 = vpop.trf.xlu0
        %v714 = vpop.trf.xlu0
        %v715 = vpop.trf.xlu0
        %v716 = vpop.trf.xlu0
        %v717 = vpop.trf.xlu0
        %v718 = vpop.trf.xlu0
        %v719 = vpop.trf.xlu0
        %v720 = vpop.trf.xlu0
        %v721 = vpop.trf.xlu0
        %v722 = vpop.trf.xlu0
        %v723 = vpop.trf.xlu0
        %v724 = vpop.trf.xlu0
        %v725 = vpop.trf.xlu0
        %v726 = vpop.trf.xlu0
        %v727 = vpop.trf.xlu0
        %s728 = scalar_lea.vmem %s626, 1 [#allocation3]
        %v729 = vld [vmem:[%s728] ss:$2 sm:$0xff]
        %730 = vxpose.xlu0.b32.start [1/16] %v729, 128
        %731 = vxpose.xlu0.b32.cont [2/16] 0.0, 128
        %732 = vxpose.xlu0.b32.cont [3/16] 0.0, 128
        %733 = vxpose.xlu0.b32.cont [4/16] 0.0, 128
        %734 = vxpose.xlu0.b32.cont [5/16] 0.0, 128
        %735 = vxpose.xlu0.b32.cont [6/16] 0.0, 128
        %736 = vxpose.xlu0.b32.cont [7/16] 0.0, 128
        %737 = vxpose.xlu0.b32.cont [8/16] 0.0, 128
        %738 = vxpose.xlu0.b32.cont [9/16] 0.0, 128
        %739 = vxpose.xlu0.b32.cont [10/16] 0.0, 128
        %740 = vxpose.xlu0.b32.cont [11/16] 0.0, 128
        %741 = vxpose.xlu0.b32.cont [12/16] 0.0, 128
        %742 = vxpose.xlu0.b32.cont [13/16] 0.0, 128
        %743 = vxpose.xlu0.b32.cont [14/16] 0.0, 128
        %744 = vxpose.xlu0.b32.cont [15/16] 0.0, 128
        %745 = vxpose.xlu0.b32.end [16/16] 0.0, 128
        %v746 = vpop.trf.xlu0
        %v747 = vpop.trf.xlu0
        %v748 = vpop.trf.xlu0
        %v749 = vpop.trf.xlu0
        %v750 = vpop.trf.xlu0
        %v751 = vpop.trf.xlu0
        %v752 = vpop.trf.xlu0
        %v753 = vpop.trf.xlu0
        %v754 = vpop.trf.xlu0
        %v755 = vpop.trf.xlu0
        %v756 = vpop.trf.xlu0
        %v757 = vpop.trf.xlu0
        %v758 = vpop.trf.xlu0
        %v759 = vpop.trf.xlu0
        %v760 = vpop.trf.xlu0
        %v761 = vpop.trf.xlu0
        %762 = vst.msk [vmem:[#allocation2] sm:$0xff] %vm215, %v746
        %763 = vst.msk [vmem:[#allocation2 + $0x8] sm:$0xff] %vm215, %v747
        %v764 = vld [vmem:[#allocation2] ss:$2 sm:$0xff]
        %765 = vxpose.xlu0.b32.start [1/16] %v764, 128
        %766 = vxpose.xlu0.b32.cont [2/16] 0.0, 128
        %767 = vxpose.xlu0.b32.cont [3/16] 0.0, 128
        %768 = vxpose.xlu0.b32.cont [4/16] 0.0, 128
        %769 = vxpose.xlu0.b32.cont [5/16] 0.0, 128
        %770 = vxpose.xlu0.b32.cont [6/16] 0.0, 128
        %771 = vxpose.xlu0.b32.cont [7/16] 0.0, 128
        %772 = vxpose.xlu0.b32.cont [8/16] 0.0, 128
        %773 = vxpose.xlu0.b32.cont [9/16] 0.0, 128
        %774 = vxpose.xlu0.b32.cont [10/16] 0.0, 128
        %775 = vxpose.xlu0.b32.cont [11/16] 0.0, 128
        %776 = vxpose.xlu0.b32.cont [12/16] 0.0, 128
        %777 = vxpose.xlu0.b32.cont [13/16] 0.0, 128
        %778 = vxpose.xlu0.b32.cont [14/16] 0.0, 128
        %779 = vxpose.xlu0.b32.cont [15/16] 0.0, 128
        %780 = vxpose.xlu0.b32.end [16/16] 0.0, 128
        %v781 = vpop.trf.xlu0
        %v782 = vpop.trf.xlu0
        %v783 = vpop.trf.xlu0
        %v784 = vpop.trf.xlu0
        %v785 = vpop.trf.xlu0
        %v786 = vpop.trf.xlu0
        %v787 = vpop.trf.xlu0
        %v788 = vpop.trf.xlu0
        %v789 = vpop.trf.xlu0
        %v790 = vpop.trf.xlu0
        %v791 = vpop.trf.xlu0
        %v792 = vpop.trf.xlu0
        %v793 = vpop.trf.xlu0
        %v794 = vpop.trf.xlu0
        %v795 = vpop.trf.xlu0
        %v796 = vpop.trf.xlu0
        %v797 = vld [vmem:[%s251] ss:$2 sm:$0xff]
        %798 = vxpose.xlu0.b32.start [1/16] %v797, 128
        %799 = vxpose.xlu0.b32.cont [2/16] 0.0, 128
        %800 = vxpose.xlu0.b32.cont [3/16] 0.0, 128
        %801 = vxpose.xlu0.b32.cont [4/16] 0.0, 128
        %802 = vxpose.xlu0.b32.cont [5/16] 0.0, 128
        %803 = vxpose.xlu0.b32.cont [6/16] 0.0, 128
        %804 = vxpose.xlu0.b32.cont [7/16] 0.0, 128
        %805 = vxpose.xlu0.b32.cont [8/16] 0.0, 128
        %806 = vxpose.xlu0.b32.cont [9/16] 0.0, 128
        %807 = vxpose.xlu0.b32.cont [10/16] 0.0, 128
        %808 = vxpose.xlu0.b32.cont [11/16] 0.0, 128
        %809 = vxpose.xlu0.b32.cont [12/16] 0.0, 128
        %810 = vxpose.xlu0.b32.cont [13/16] 0.0, 128
        %811 = vxpose.xlu0.b32.cont [14/16] 0.0, 128
        %812 = vxpose.xlu0.b32.cont [15/16] 0.0, 128
        %813 = vxpose.xlu0.b32.end [16/16] 0.0, 128
        %v814 = vpop.trf.xlu0
        %v815 = vpop.trf.xlu0
        %v816 = vpop.trf.xlu0
        %v817 = vpop.trf.xlu0
        %v818 = vpop.trf.xlu0
        %v819 = vpop.trf.xlu0
        %v820 = vpop.trf.xlu0
        %v821 = vpop.trf.xlu0
        %v822 = vpop.trf.xlu0
        %v823 = vpop.trf.xlu0
        %v824 = vpop.trf.xlu0
        %v825 = vpop.trf.xlu0
        %v826 = vpop.trf.xlu0
        %v827 = vpop.trf.xlu0
        %v828 = vpop.trf.xlu0
        %v829 = vpop.trf.xlu0
        %v830 = vadd.f32 %v679, %v712
        %v831 = vadd.f32 %v830, %v781
        %v832 = vadd.f32 %v831, %v814
        %v833 = vmul.f32 %v832, 0.25
        %s834 = scalar_lea.vmem %s178, 16 [#allocation6]
        %835 = vst.msk [vmem:[%s834] sm:$0xff] %vm215, %v833
        %v836 = vsub.f32 %v679, %v833
        %s837 = scalar_lea.vmem %s178, 48 [#allocation6]
        %838 = vst.msk [vmem:[%s837] sm:$0xff] %vm215, %v836
        %v839 = vsub.f32 %v712, %v833
        %s840 = scalar_lea.vmem %s178, 80 [#allocation6]
        %841 = vst.msk [vmem:[%s840] sm:$0xff] %vm215, %v839
        %v842 = vsub.f32 %v781, %v833
        %s843 = scalar_lea.vmem %s178, 112 [#allocation6]
        %844 = vst.msk [vmem:[%s843] sm:$0xff] %vm215, %v842
        %v845 = vsub.f32 %v814, %v833
        %s846 = scalar_lea.vmem %s178, 144 [#allocation6]
        %847 = vst.msk [vmem:[%s846] sm:$0xff] %vm215, %v845
        %s848 = scalar_lea.vmem %s160, 48 [#allocation3]
        %v849 = vld [vmem:[%s848] ss:$2 sm:$0xff]
        %850 = vxpose.xlu0.b32.start [1/16] %v849, 128
        %851 = vxpose.xlu0.b32.cont [2/16] 0.0, 128
        %852 = vxpose.xlu0.b32.cont [3/16] 0.0, 128
        %853 = vxpose.xlu0.b32.cont [4/16] 0.0, 128
        %854 = vxpose.xlu0.b32.cont [5/16] 0.0, 128
        %855 = vxpose.xlu0.b32.cont [6/16] 0.0, 128
        %856 = vxpose.xlu0.b32.cont [7/16] 0.0, 128
        %857 = vxpose.xlu0.b32.cont [8/16] 0.0, 128
        %858 = vxpose.xlu0.b32.cont [9/16] 0.0, 128
        %859 = vxpose.xlu0.b32.cont [10/16] 0.0, 128
        %860 = vxpose.xlu0.b32.cont [11/16] 0.0, 128
        %861 = vxpose.xlu0.b32.cont [12/16] 0.0, 128
        %862 = vxpose.xlu0.b32.cont [13/16] 0.0, 128
        %863 = vxpose.xlu0.b32.cont [14/16] 0.0, 128
        %864 = vxpose.xlu0.b32.cont [15/16] 0.0, 128
        %865 = vxpose.xlu0.b32.end [16/16] 0.0, 128
        %v866 = vpop.trf.xlu0
        %v867 = vpop.trf.xlu0
        %v868 = vpop.trf.xlu0
        %v869 = vpop.trf.xlu0
        %v870 = vpop.trf.xlu0
        %v871 = vpop.trf.xlu0
        %v872 = vpop.trf.xlu0
        %v873 = vpop.trf.xlu0
        %v874 = vpop.trf.xlu0
        %v875 = vpop.trf.xlu0
        %v876 = vpop.trf.xlu0
        %v877 = vpop.trf.xlu0
        %v878 = vpop.trf.xlu0
        %v879 = vpop.trf.xlu0
        %v880 = vpop.trf.xlu0
        %v881 = vpop.trf.xlu0
        %882 = vst.msk [vmem:[#allocation2] sm:$0xff] %vm215, %v866
        %883 = vst.msk [vmem:[#allocation2 + $0x8] sm:$0xff] %vm215, %v867
        %v884 = vld [vmem:[#allocation2] ss:$2 sm:$0xff]
        %885 = vxpose.xlu0.b32.start [1/16] %v884, 128
        %886 = vxpose.xlu0.b32.cont [2/16] 0.0, 128
        %887 = vxpose.xlu0.b32.cont [3/16] 0.0, 128
        %888 = vxpose.xlu0.b32.cont [4/16] 0.0, 128
        %889 = vxpose.xlu0.b32.cont [5/16] 0.0, 128
        %890 = vxpose.xlu0.b32.cont [6/16] 0.0, 128
        %891 = vxpose.xlu0.b32.cont [7/16] 0.0, 128
        %892 = vxpose.xlu0.b32.cont [8/16] 0.0, 128
        %893 = vxpose.xlu0.b32.cont [9/16] 0.0, 128
        %894 = vxpose.xlu0.b32.cont [10/16] 0.0, 128
        %895 = vxpose.xlu0.b32.cont [11/16] 0.0, 128
        %896 = vxpose.xlu0.b32.cont [12/16] 0.0, 128
        %897 = vxpose.xlu0.b32.cont [13/16] 0.0, 128
        %898 = vxpose.xlu0.b32.cont [14/16] 0.0, 128
        %899 = vxpose.xlu0.b32.cont [15/16] 0.0, 128
        %900 = vxpose.xlu0.b32.end [16/16] 0.0, 128
        %v901 = vpop.trf.xlu0
        %v902 = vpop.trf.xlu0
        %v903 = vpop.trf.xlu0
        %v904 = vpop.trf.xlu0
        %v905 = vpop.trf.xlu0
        %v906 = vpop.trf.xlu0
        %v907 = vpop.trf.xlu0
        %v908 = vpop.trf.xlu0
        %v909 = vpop.trf.xlu0
        %v910 = vpop.trf.xlu0
        %v911 = vpop.trf.xlu0
        %v912 = vpop.trf.xlu0
        %v913 = vpop.trf.xlu0
        %v914 = vpop.trf.xlu0
        %v915 = vpop.trf.xlu0
        %v916 = vpop.trf.xlu0
        %v917 = vld [vmem:[%s251] ss:$2 sm:$0xff]
        %918 = vxpose.xlu0.b32.start [1/16] %v917, 128
        %919 = vxpose.xlu0.b32.cont [2/16] 0.0, 128
        %920 = vxpose.xlu0.b32.cont [3/16] 0.0, 128
        %921 = vxpose.xlu0.b32.cont [4/16] 0.0, 128
        %922 = vxpose.xlu0.b32.cont [5/16] 0.0, 128
        %923 = vxpose.xlu0.b32.cont [6/16] 0.0, 128
        %924 = vxpose.xlu0.b32.cont [7/16] 0.0, 128
        %925 = vxpose.xlu0.b32.cont [8/16] 0.0, 128
        %926 = vxpose.xlu0.b32.cont [9/16] 0.0, 128
        %927 = vxpose.xlu0.b32.cont [10/16] 0.0, 128
        %928 = vxpose.xlu0.b32.cont [11/16] 0.0, 128
        %929 = vxpose.xlu0.b32.cont [12/16] 0.0, 128
        %930 = vxpose.xlu0.b32.cont [13/16] 0.0, 128
        %931 = vxpose.xlu0.b32.cont [14/16] 0.0, 128
        %932 = vxpose.xlu0.b32.cont [15/16] 0.0, 128
        %933 = vxpose.xlu0.b32.end [16/16] 0.0, 128
        %v934 = vpop.trf.xlu0
        %v935 = vpop.trf.xlu0
        %v936 = vpop.trf.xlu0
        %v937 = vpop.trf.xlu0
        %v938 = vpop.trf.xlu0
        %v939 = vpop.trf.xlu0
        %v940 = vpop.trf.xlu0
        %v941 = vpop.trf.xlu0
        %v942 = vpop.trf.xlu0
        %v943 = vpop.trf.xlu0
        %v944 = vpop.trf.xlu0
        %v945 = vpop.trf.xlu0
        %v946 = vpop.trf.xlu0
        %v947 = vpop.trf.xlu0
        %v948 = vpop.trf.xlu0
        %v949 = vpop.trf.xlu0
        %s950 = scalar_lea.vmem %s848, 1 [#allocation3]
        %v951 = vld [vmem:[%s950] ss:$2 sm:$0xff]
        %952 = vxpose.xlu0.b32.start [1/16] %v951, 128
        %953 = vxpose.xlu0.b32.cont [2/16] 0.0, 128
        %954 = vxpose.xlu0.b32.cont [3/16] 0.0, 128
        %955 = vxpose.xlu0.b32.cont [4/16] 0.0, 128
        %956 = vxpose.xlu0.b32.cont [5/16] 0.0, 128
        %957 = vxpose.xlu0.b32.cont [6/16] 0.0, 128
        %958 = vxpose.xlu0.b32.cont [7/16] 0.0, 128
        %959 = vxpose.xlu0.b32.cont [8/16] 0.0, 128
        %960 = vxpose.xlu0.b32.cont [9/16] 0.0, 128
        %961 = vxpose.xlu0.b32.cont [10/16] 0.0, 128
        %962 = vxpose.xlu0.b32.cont [11/16] 0.0, 128
        %963 = vxpose.xlu0.b32.cont [12/16] 0.0, 128
        %964 = vxpose.xlu0.b32.cont [13/16] 0.0, 128
        %965 = vxpose.xlu0.b32.cont [14/16] 0.0, 128
        %966 = vxpose.xlu0.b32.cont [15/16] 0.0, 128
        %967 = vxpose.xlu0.b32.end [16/16] 0.0, 128
        %v968 = vpop.trf.xlu0
        %v969 = vpop.trf.xlu0
        %v970 = vpop.trf.xlu0
        %v971 = vpop.trf.xlu0
        %v972 = vpop.trf.xlu0
        %v973 = vpop.trf.xlu0
        %v974 = vpop.trf.xlu0
        %v975 = vpop.trf.xlu0
        %v976 = vpop.trf.xlu0
        %v977 = vpop.trf.xlu0
        %v978 = vpop.trf.xlu0
        %v979 = vpop.trf.xlu0
        %v980 = vpop.trf.xlu0
        %v981 = vpop.trf.xlu0
        %v982 = vpop.trf.xlu0
        %v983 = vpop.trf.xlu0
        %984 = vst.msk [vmem:[#allocation2] sm:$0xff] %vm215, %v968
        %985 = vst.msk [vmem:[#allocation2 + $0x8] sm:$0xff] %vm215, %v969
        %v986 = vld [vmem:[#allocation2] ss:$2 sm:$0xff]
        %987 = vxpose.xlu0.b32.start [1/16] %v986, 128
        %988 = vxpose.xlu0.b32.cont [2/16] 0.0, 128
        %989 = vxpose.xlu0.b32.cont [3/16] 0.0, 128
        %990 = vxpose.xlu0.b32.cont [4/16] 0.0, 128
        %991 = vxpose.xlu0.b32.cont [5/16] 0.0, 128
        %992 = vxpose.xlu0.b32.cont [6/16] 0.0, 128
        %993 = vxpose.xlu0.b32.cont [7/16] 0.0, 128
        %994 = vxpose.xlu0.b32.cont [8/16] 0.0, 128
        %995 = vxpose.xlu0.b32.cont [9/16] 0.0, 128
        %996 = vxpose.xlu0.b32.cont [10/16] 0.0, 128
        %997 = vxpose.xlu0.b32.cont [11/16] 0.0, 128
        %998 = vxpose.xlu0.b32.cont [12/16] 0.0, 128
        %999 = vxpose.xlu0.b32.cont [13/16] 0.0, 128
        %1000 = vxpose.xlu0.b32.cont [14/16] 0.0, 128
        %1001 = vxpose.xlu0.b32.cont [15/16] 0.0, 128
        %1002 = vxpose.xlu0.b32.end [16/16] 0.0, 128
        %v1003 = vpop.trf.xlu0
        %v1004 = vpop.trf.xlu0
        %v1005 = vpop.trf.xlu0
        %v1006 = vpop.trf.xlu0
        %v1007 = vpop.trf.xlu0
        %v1008 = vpop.trf.xlu0
        %v1009 = vpop.trf.xlu0
        %v1010 = vpop.trf.xlu0
        %v1011 = vpop.trf.xlu0
        %v1012 = vpop.trf.xlu0
        %v1013 = vpop.trf.xlu0
        %v1014 = vpop.trf.xlu0
        %v1015 = vpop.trf.xlu0
        %v1016 = vpop.trf.xlu0
        %v1017 = vpop.trf.xlu0
        %v1018 = vpop.trf.xlu0
        %v1019 = vld [vmem:[%s251] ss:$2 sm:$0xff]
        %1020 = vxpose.xlu0.b32.start [1/16] %v1019, 128
        %1021 = vxpose.xlu0.b32.cont [2/16] 0.0, 128
        %1022 = vxpose.xlu0.b32.cont [3/16] 0.0, 128
        %1023 = vxpose.xlu0.b32.cont [4/16] 0.0, 128
        %1024 = vxpose.xlu0.b32.cont [5/16] 0.0, 128
        %1025 = vxpose.xlu0.b32.cont [6/16] 0.0, 128
        %1026 = vxpose.xlu0.b32.cont [7/16] 0.0, 128
        %1027 = vxpose.xlu0.b32.cont [8/16] 0.0, 128
        %1028 = vxpose.xlu0.b32.cont [9/16] 0.0, 128
        %1029 = vxpose.xlu0.b32.cont [10/16] 0.0, 128
        %1030 = vxpose.xlu0.b32.cont [11/16] 0.0, 128
        %1031 = vxpose.xlu0.b32.cont [12/16] 0.0, 128
        %1032 = vxpose.xlu0.b32.cont [13/16] 0.0, 128
        %1033 = vxpose.xlu0.b32.cont [14/16] 0.0, 128
        %1034 = vxpose.xlu0.b32.cont [15/16] 0.0, 128
        %1035 = vxpose.xlu0.b32.end [16/16] 0.0, 128
        %v1036 = vpop.trf.xlu0
        %v1037 = vpop.trf.xlu0
        %v1038 = vpop.trf.xlu0
        %v1039 = vpop.trf.xlu0
        %v1040 = vpop.trf.xlu0
        %v1041 = vpop.trf.xlu0
        %v1042 = vpop.trf.xlu0
        %v1043 = vpop.trf.xlu0
        %v1044 = vpop.trf.xlu0
        %v1045 = vpop.trf.xlu0
        %v1046 = vpop.trf.xlu0
        %v1047 = vpop.trf.xlu0
        %v1048 = vpop.trf.xlu0
        %v1049 = vpop.trf.xlu0
        %v1050 = vpop.trf.xlu0
        %v1051 = vpop.trf.xlu0
        %v1052 = vadd.f32 %v901, %v934
        %v1053 = vadd.f32 %v1052, %v1003
        %v1054 = vadd.f32 %v1053, %v1036
        %v1055 = vmul.f32 %v1054, 0.25
        %s1056 = scalar_lea.vmem %s178, 24 [#allocation6]
        %1057 = vst.msk [vmem:[%s1056] sm:$0xff] %vm215, %v1055
        %v1058 = vsub.f32 %v901, %v1055
        %s1059 = scalar_lea.vmem %s178, 56 [#allocation6]
        %1060 = vst.msk [vmem:[%s1059] sm:$0xff] %vm215, %v1058
        %v1061 = vsub.f32 %v934, %v1055
        %s1062 = scalar_lea.vmem %s178, 88 [#allocation6]
        %1063 = vst.msk [vmem:[%s1062] sm:$0xff] %vm215, %v1061
        %v1064 = vsub.f32 %v1003, %v1055
        %s1065 = scalar_lea.vmem %s178, 120 [#allocation6]
        %1066 = vst.msk [vmem:[%s1065] sm:$0xff] %vm215, %v1064
        %v1067 = vsub.f32 %v1036, %v1055
        %s1068 = scalar_lea.vmem %s178, 152 [#allocation6]
        %1069 = vst.msk [vmem:[%s1068] sm:$0xff] %vm215, %v1067
        %s1070 = sand.u32 %s90, 1
        %s1071 = scalar_lea.sflag [#allocation5], %s1070
        %s1072 = sand.u32 %s90, 1
        %s1073 = smul.addr %s1072, 160
        %s1074 = scalar_lea.vmem [#allocation6], %s1073
        // Predicated region
        $region29: #{tpu_custom_call.1} parent=23 // pred_check
          %p1075 = pneg %p100
        $region30: #{tpu_custom_call.1} parent=23 // pred_check_branch
          %1077 = sbr.rel (%p1075) target = $region32
        $region31: #{tpu_custom_call.1} parent=23 // pred_region
          %s1078 = smul.u32 4, %s25
          %s1080 = ssub.s32 2560, 2560
          %1081 = vsyncadd %s1071, %s1080
          %s1082 = sadd.s32 %s27, %s26
          %s1083 = sadd.s32 %s1082, %s1078
          %s1084 = smul.addr %s24, 20
          %s1085 = sadd.s32 %s1083, %s1084
          %s1086 = smul.addr %s1085, 128
          %s1087 = scalar_lea.hbm %s1, %s1086
          %s1088 = sshll.u32 %s1074, 4
          %s1089 = int_to_ptr.vmem [resolvable:$true] %s1088
          %1094 = dma.vmem_to_hbm [thread:$0]  %s1089, 2560, %s1087, %s1071, 128, 128, 8
        $region32: #{tpu_custom_call.1} parent=23 // pred_fallthru
          _
      $region24: #{tpu_custom_call.1} parent=5 // pred_fallthru
        _
      %p1095 = scmp.le.s32.totalorder 2, %s13
      // Predicated region
      $region33: #{tpu_custom_call.1} parent=5 // pred_check
        %p1096 = pneg %p1095
      $region34: #{tpu_custom_call.1} parent=5 // pred_check_branch
        %1098 = sbr.rel (%p1096) target = $region36
      $region35: #{tpu_custom_call.1} parent=5 // pred_region
        %s1099 = ssub.s32 %s13, 2
        // Predicated region
        $region37: #{tpu_custom_call.1} parent=35 // pred_check
          %p1100 = pneg %p106
        $region38: #{tpu_custom_call.1} parent=35 // pred_check_branch
          %1102 = sbr.rel (%p1100) target = $region40
        $region39: #{tpu_custom_call.1} parent=35 // pred_region
          %s1103 = sand.u32 %s91, 1
          %s1104 = scalar_lea.sflag [#allocation5], %s1103
          %s1105 = sand.u32 %s91, 1
          %s1106 = smul.addr %s1105, 160
          %s1107 = scalar_lea.vmem [#allocation6], %s1106
          %1108 = dma.done %s1104, 2560
        $region40: #{tpu_custom_call.1} parent=35 // pred_fallthru
          _
      $region36: #{tpu_custom_call.1} parent=5 // pred_fallthru
        _
    $region6: #{tpu_custom_call.1} parent=1 // loop_footer
      %s17 = sadd.s32 1, %s13
    $region7: #{tpu_custom_call.1} parent=1 // loop_footer_branch
      %12 = sbr.rel target = $region3
    $region8: #{tpu_custom_call.1} parent=1 // loop_exit
      _
    %1109 = vsyncpa [#allocation4], 1
    %s1110 = scalar_lea.sflag [#allocation4], 1
    %1111 = vsyncpa %s1110, 1
    %1112 = vsyncpa [#allocation5], 1
    %s1113 = scalar_lea.sflag [#allocation5], 1
    %1114 = vsyncpa %s1113, 1

// kernel: tpu_custom_call.1
$region0: #{tpu_custom_call.1}
  #allocation0 [shape = 'u32[]', space=smem, size = 0x4, offset = 0x4, fixed_abs, tag = 'smem constant byte address 0x4 - core index']
  #allocation1 [shape = 'u32[144,128]{1,0:T(1,128)}', space=vmem, size = 0x12000, scoped, tag = 'internal scratch']
  %s0 = inlined_call_operand.hbm [shape: f32[2,4,256], index: 0, kind: input, shape index: {}]
  %s1 = inlined_call_operand.vmem [shape: f32[2,5,256], index: 1, kind: output, shape index: {}]
  %s2 = sld [smem:[#allocation0]]
  $region41: #{tpu_custom_call.1} parent=0
    _
  %s4 = ssub.s32 1, %s2
  %s5 = scalar_select 0, %s4, %s2
  $region1: #{tpu_custom_call.1} parent=0
    #allocation2 [shape = 'u8[8192]{0}', space=vmem, size = 0x2000, scoped, tag = 'input window, operand 0']
    #allocation3 [shape = 's32[2]{0}', space=sflag, size = 0x8, scoped, tag = 'scoped memory for tpu_custom_call.1']
    %6 = vsyncpa [#allocation3], 0
    %s7 = scalar_lea.sflag [#allocation3], 1
    %8 = vsyncpa %s7, 0
    loop: start=0, step=1, limit=4
    $region2: #{tpu_custom_call.1} parent=1 // loop_pre_header
      _
    $region3: #{tpu_custom_call.1} parent=1 // loop_header
      %s10 = sphi 0, %s14
      %p11 = scmp.ge.s32.totalorder %s10, 4
      %s17 = sphi 0, %s29
      %s18 = sphi 0, %s25
      %s19 = sphi 0, %s17
      %s20 = sphi 0, %s18
      %s21 = sphi 0, %s19
      %s22 = sphi 0, %s20
      %s34 = sphi 0, %s36
      %s37 = sphi 0, %s34
      %s38 = sphi 0, %s37
      %s54 = sphi 0, %s38
      %s62 = sphi 0, %s64
      %s65 = sphi 0, %s62
      %s66 = sphi 0, %s65
      %s82 = sphi 0, %s66
    $region4: #{tpu_custom_call.1} parent=1 // loop_header_branch
      %13 = sbr.rel (%p11) target = $region8
    $region5: #{tpu_custom_call.1} parent=1 // loop_body
      %s15 = ssub.s32 %s10, 1
      %s16 = ssub.s32 %s10, 2
      %s23 = sadd.s32 1, %s18
      %p24 = scmp.ge.s32.totalorder %s23, 1
      %s25 = scalar_select %p24, 0, %s23
      %s26 = sadd.s32 1, %s17
      %s27 = scalar_select %p24, %s26, %s17
      %p28 = scmp.ge.s32.totalorder %s27, 2
      %s29 = scalar_select %p28, 0, %s27
      %s30 = ssub.s32 %s17, %s29
      %s31 = ssub.s32 %s18, %s25
      %s32 = sor.u32 %s30, %s31
      %p33 = scmp.eq.s32.totalorder %s32, 0
      %s35 = sadd.s32 %s34, 1
      %s36 = scalar_select %p33, %s34, %s35
      %p39 = pneg %p33
      %p40 = scmp.eq.s32.totalorder %s10, 1
      %p41 = por %p39, %p40
      %p42 = scmp.ne.s32.totalorder %s34, %s37
      %p43 = scmp.eq.s32.totalorder %s10, 0
      %p44 = por %p42, %p43
      %p45 = scmp.ne.s32.totalorder %s34, %s37
      %p46 = scmp.eq.s32.totalorder %s15, 1
      %p47 = por %p45, %p46
      %p48 = scmp.ne.s32.totalorder %s37, %s38
      %p49 = scmp.eq.s32.totalorder %s15, 0
      %p50 = por %p48, %p49
      %p51 = scmp.ne.s32.totalorder %s37, %s38
      %p52 = scmp.eq.s32.totalorder %s16, 1
      %p53 = por %p51, %p52
      %p55 = scmp.ne.s32.totalorder %s38, %s54
      %p56 = scmp.eq.s32.totalorder %s16, 0
      %p57 = por %p55, %p56
      %s58 = ssub.s32 %s17, %s29
      %s59 = ssub.s32 %s18, %s25
      %s60 = sor.u32 %s58, %s59
      %p61 = scmp.eq.s32.totalorder %s60, 0
      %s63 = sadd.s32 %s62, 1
      %s64 = scalar_select %p61, %s62, %s63
      %p67 = pneg %p61
      %p68 = scmp.eq.s32.totalorder %s10, 1
      %p69 = por %p67, %p68
      %p70 = scmp.ne.s32.totalorder %s62, %s65
      %p71 = scmp.eq.s32.totalorder %s10, 0
      %p72 = por %p70, %p71
      %p73 = scmp.ne.s32.totalorder %s62, %s65
      %p74 = scmp.eq.s32.totalorder %s15, 1
      %p75 = por %p73, %p74
      %p76 = scmp.ne.s32.totalorder %s65, %s66
      %p77 = scmp.eq.s32.totalorder %s15, 0
      %p78 = por %p76, %p77
      %p79 = scmp.ne.s32.totalorder %s65, %s66
      %p80 = scmp.eq.s32.totalorder %s16, 1
      %p81 = por %p79, %p80
      %p83 = scmp.ne.s32.totalorder %s66, %s82
      %p84 = scmp.eq.s32.totalorder %s16, 0
      %p85 = por %p83, %p84
      %p86 = scmp.le.s32.totalorder 1, %s10
      %p87 = scmp.lt.s32.totalorder %s10, 3
      %p88 = pnand %p86, %p87
      %p89 = pneg %p88
      // Predicated region
      $region9: #{tpu_custom_call.1} parent=5 // pred_check
        _
      $region10: #{tpu_custom_call.1} parent=5 // pred_check_branch
        %91 = sbr.rel (%p88) target = $region12
      $region11: #{tpu_custom_call.1} parent=5 // pred_region
        %s92 = ssub.s32 %s10, 1
      $region12: #{tpu_custom_call.1} parent=5 // pred_fallthru
        _
      %p93 = scmp.lt.s32.totalorder %s10, 2
      // Predicated region
      $region13: #{tpu_custom_call.1} parent=5 // pred_check
        %p94 = pneg %p93
      $region14: #{tpu_custom_call.1} parent=5 // pred_check_branch
        %96 = sbr.rel (%p94) target = $region16
      $region15: #{tpu_custom_call.1} parent=5 // pred_region
        // Predicated region
        $region17: #{tpu_custom_call.1} parent=15 // pred_check
          %p97 = pneg %p44
        $region18: #{tpu_custom_call.1} parent=15 // pred_check_branch
          %99 = sbr.rel (%p97) target = $region20
        $region19: #{tpu_custom_call.1} parent=15 // pred_region
          %s100 = sand.u32 %s34, 1
          %s101 = scalar_lea.sflag [#allocation3], %s100
          %s102 = sand.u32 %s34, 1
          %s103 = smul.addr %s102, 8
          %s104 = scalar_lea.vmem [#allocation2], %s103
          %s105 = smul.u32 2, %s18
          %s107 = ssub.s32 128, 128
          %108 = vsyncadd %s101, %s107
          %s109 = smul.addr %s17, 2
          %s110 = sadd.s32 %s105, %s109
          %s111 = smul.addr %s110, 64
          %s112 = scalar_lea.hbm %s0, %s111
          %s114 = sshll.u32 %s104, 4
          %s115 = int_to_ptr.vmem [resolvable:$true] %s114
          %117 = dma.hbm_to_vmem [thread:$0]  %s112, 128, %s115, %s101
        $region20: #{tpu_custom_call.1} parent=15 // pred_fallthru
          _
      $region16: #{tpu_custom_call.1} parent=5 // pred_fallthru
        _
      %p118 = scmp.le.s32.totalorder 1, %s10
      %p119 = scmp.lt.s32.totalorder %s10, 3
      %p120 = pnand %p118, %p119
      %p121 = pneg %p120
      // Predicated region
      $region21: #{tpu_custom_call.1} parent=5 // pred_check
        _
      $region22: #{tpu_custom_call.1} parent=5 // pred_check_branch
        %123 = sbr.rel (%p120) target = $region24
      $region23: #{tpu_custom_call.1} parent=5 // pred_region
        %s124 = ssub.s32 %s10, 1
        %s125 = sand.u32 %s37, 1
        %s126 = scalar_lea.sflag [#allocation3], %s125
        %s127 = sand.u32 %s37, 1
        %s128 = smul.addr %s127, 8
        %s129 = scalar_lea.vmem [#allocation2], %s128
        // Predicated region
        $region25: #{tpu_custom_call.1} parent=23 // pred_check
          %p130 = pneg %p50
        $region26: #{tpu_custom_call.1} parent=23 // pred_check_branch
          %132 = sbr.rel (%p130) target = $region28
        $region27: #{tpu_custom_call.1} parent=23 // pred_region
          %133 = dma.done %s126, 128
        $region28: #{tpu_custom_call.1} parent=23 // pred_fallthru
          _
        %s134 = sand.u32 %s37, 1
        %s135 = scalar_lea.sflag [#allocation3], %s134
        %s136 = sand.u32 %s37, 1
        %s137 = smul.addr %s136, 8
        %s138 = scalar_lea.vmem [#allocation2], %s137
        %p139 = pneg %p50
        %p140 = pneg %p47
        %p141 = pneg %p78
        %p142 = pneg %p75
        %s143 = smul.u32 2, %s20
        %p144 = scmp.lt.s32.totalorder %s19, 1
        %s145 = scalar_select %p144, %s19, 1
        %p146 = scmp.lt.s32.totalorder %s143, 1
        %s147 = scalar_select %p146, %s143, 1
        %s148 = smul.addr %s145, 2
        %s149 = sadd.s32 %s147, %s148
        %s150 = smul.addr %s149, 8
        %s151 = scalar_lea.vmem %s1, %s150
        %s152 = smul.u32 2, %s20
        %s153 = smul.u32 2, %s20
        %p154 = scmp.lt.s32.totalorder %s19, 1
        %s155 = scalar_select %p154, %s19, 1
        %p156 = scmp.lt.s32.totalorder %s153, 1
        %s157 = scalar_select %p156, %s153, 1
        %s158 = smul.addr %s155, 2
        %s159 = sadd.s32 %s157, %s158
        %s160 = smul.addr %s159, 8
        %s161 = scalar_lea.vmem %s1, %s160
        %s162 = smul.u32 2, %s20
        %v163 = vld [vmem:[%s129] sm:$0xff]
        %v165 = vcombine.high %v163, %v163
        %vm167 = vcmask 1043456
        %v168 = vsel %vm167, %v163, 0.0
        %v169 = vrot.slane %v168, 4
        %v170 = vadd.f32 %v168, %v169
        %v171 = vrot.slane %v170, 2
        %v172 = vadd.f32 %v170, %v171
        %v173 = vrot.slane %v172, 1
        %v174 = vadd.f32 %v172, %v173
        %v175 = vsel %vm167, %v165, 0.0
        %v176 = vrot.slane %v175, 4
        %v177 = vadd.f32 %v175, %v176
        %v178 = vrot.slane %v177, 2
        %v179 = vadd.f32 %v177, %v178
        %v180 = vrot.slane %v179, 1
        %v181 = vadd.f32 %v179, %v180
        %v182 = vmul.f32 %v174, 0.25
        %v183 = vmul.f32 %v181, 0.25
        %v186 = vcombine.low %v182, %v183
        %v188 = vunpack.c.l.s4 1966171168
        %v189 = vunpack.c.0.s8 %v188
        %v190 = vlaneseq
        %v191 = vshrl.u32 %v190, 7
        %v192 = vsub.s32 %v189, %v191
        %v193 = vrot.slane %v186, %v192
        %v195 = vunpack.c.l.s4 1966171168
        %v196 = vunpack.c.0.s8 %v195
        %v197 = vlaneseq
        %v198 = vshrl.u32 %v197, 7
        %v199 = vsub.s32 %v196, %v198
        %v200 = vrot.slane %v193, %v199
        %v202 = vlaneseq
        %vm203 = vcmp.ge.s32.totalorder %v202, 0
        %vm204 = vcmp.lt.s32.totalorder %v202, 256
        %vm205 = vmand %vm203, %vm204
        %206 = vst.msk [vmem:[%s161] ss:$8 sm:$0x3] %vm205, %v200
        %207 = vst.msk [vmem:[%s161] ss:$8 sm:$0x0] %vm205, %v200
        %v209 = vsub.f32 %v163, %v186
        %v211 = vcombine.high %v209, %v209
        %v212 = vrot.slane %v209, 7
        %v213 = vrot.slane %v211, 7
        %216 = vst [vmem:[%s161] sm:$0x1e] %v212
        %217 = vst [vmem:[%s161 + $0x8] sm:$0x1e] %v213
        %s218 = smul.u32 2, %s20
        %p219 = scmp.lt.s32.totalorder %s19, 1
        %s220 = scalar_select %p219, %s19, 1
        %p221 = scmp.lt.s32.totalorder %s218, 1
        %s222 = scalar_select %p221, %s218, 1
        %s223 = smul.addr %s220, 2
        %s224 = sadd.s32 %s222, %s223
        %s225 = smul.addr %s224, 8
        %s226 = scalar_lea.vmem %s1, %s225
        // Predicated region
        $region29: #{tpu_custom_call.1} parent=23 // pred_check
          %p227 = pneg %p75
        $region30: #{tpu_custom_call.1} parent=23 // pred_check_branch
          %229 = sbr.rel (%p227) target = $region32
        $region31: #{tpu_custom_call.1} parent=23 // pred_region
          %s230 = smul.u32 2, %s20
        $region32: #{tpu_custom_call.1} parent=23 // pred_fallthru
          _
      $region24: #{tpu_custom_call.1} parent=5 // pred_fallthru
        _
      %p231 = scmp.le.s32.totalorder 2, %s10
      // Predicated region
      $region33: #{tpu_custom_call.1} parent=5 // pred_check
        %p232 = pneg %p231
      $region34: #{tpu_custom_call.1} parent=5 // pred_check_branch
        %234 = sbr.rel (%p232) target = $region36
      $region35: #{tpu_custom_call.1} parent=5 // pred_region
        %s235 = ssub.s32 %s10, 2
        // Predicated region
        $region37: #{tpu_custom_call.1} parent=35 // pred_check
          %p236 = pneg %p81
        $region38: #{tpu_custom_call.1} parent=35 // pred_check_branch
          %238 = sbr.rel (%p236) target = $region40
        $region39: #{tpu_custom_call.1} parent=35 // pred_region
          %s239 = smul.u32 2, %s22
          %p240 = scmp.lt.s32.totalorder %s21, 1
          %s241 = scalar_select %p240, %s21, 1
          %p242 = scmp.lt.s32.totalorder %s239, 1
          %s243 = scalar_select %p242, %s239, 1
          %s244 = smul.addr %s241, 2
          %s245 = sadd.s32 %s243, %s244
          %s246 = smul.addr %s245, 8
          %s247 = scalar_lea.vmem %s1, %s246
        $region40: #{tpu_custom_call.1} parent=35 // pred_fallthru
          _
      $region36: #{tpu_custom_call.1} parent=5 // pred_fallthru
        _
    $region6: #{tpu_custom_call.1} parent=1 // loop_footer
      %s14 = sadd.s32 1, %s10
    $region7: #{tpu_custom_call.1} parent=1 // loop_footer_branch
      %9 = sbr.rel target = $region3
    $region8: #{tpu_custom_call.1} parent=1 // loop_exit
      _
    %248 = vsyncpa [#allocation3], 1
    %s249 = scalar_lea.sflag [#allocation3], 1
    %250 = vsyncpa %s249, 1

</llo_original>
